<compile_context>
chip_gen: v7x
topology: tpu7x:2x2x1
jax: 0.10.0
libtpu: 0.0.40
codegen_flags: <defaults>
</compile_context>

<pallas_src>
import functools

import jax
import jax.numpy as jnp
from jax import lax
from jax.experimental import pallas as pl
from jax.experimental.pallas import tpu as pltpu


def _round_up(x, m):
    return ((x + m - 1) // m) * m


def _local_agg_kernel(h_ref, adj_ref, a_ref, mrow_ref, o_ref, hk_ref, *, neg_slope):
    # h_ref:    (Np, Dp)    full keys/values for this batch element (resident across rows)
    # adj_ref:  (TM, Np)    int8 edge types for this query-row block
    # a_ref:    (4, Dp)     attention vectors a_0..a_3 (input dtype, D padded)
    # mrow_ref: (1, Np)     f32 mask row: -9e15 for real columns, -1e30 for padded columns
    # o_ref:    (TM, Dp)    output block (lane-dense)
    # hk_ref:   (4*TM, Dp)  VMEM scratch for the edge-type-scaled query rows
    tm, dp = o_ref.shape
    n = h_ref.shape[0]

    row0 = pl.multiple_of(pl.program_id(1) * tm, tm)
    hq = h_ref[pl.ds(row0, tm), :]                      # (TM, Dp) query rows, input dtype
    a = a_ref[...]                                      # (4, Dp)  input dtype

    # Per-edge-type scaled queries written straight into VMEM scratch (no concat).
    hk_ref[0 * tm:1 * tm, :] = hq * a[0:1, :]
    hk_ref[1 * tm:2 * tm, :] = hq * a[1:2, :]
    hk_ref[2 * tm:3 * tm, :] = hq * a[2:3, :]
    hk_ref[3 * tm:4 * tm, :] = hq * a[3:4, :]

    h = h_ref[...]                                      # (Np, Dp) keys/values, input dtype
    # One fused score matmul, contracting the shared last dim (no transpose of h):
    #   e[k*TM + i, j] = sum_d hq[i,d] * a_k[d] * h[j,d]
    e = lax.dot_general(hk_ref[...], h, (((1,), (1,)), ((), ())),
                        preferred_element_type=jnp.float32)      # (4*TM, Np) f32

    adj = adj_ref[...].astype(jnp.int32)                # int8 HBM stream, widened once
    base = jnp.broadcast_to(mrow_ref[...], (tm, n))     # -9e15 real / -1e30 padded cols
    att = jnp.where(adj == 1, e[0 * tm:1 * tm], base)
    att = jnp.where(adj == 2, e[1 * tm:2 * tm], att)
    att = jnp.where(adj == 3, e[2 * tm:3 * tm], att)
    att = jnp.where(adj == 4, e[3 * tm:4 * tm], att)

    # LeakyReLU after selection (selected values identical to reference; mask values
    # become neg_slope * mask which still underflows exp() -> softmax unchanged).
    att = jnp.where(att > 0, att, neg_slope * att)

    # Row softmax. All-masked rows degenerate to uniform weights over the REAL
    # columns (padded columns carry the much more negative -1e30 mask), matching
    # the PyTorch reference exactly.
    m = jnp.max(att, axis=-1, keepdims=True)
    p = jnp.exp(att - m)
    denom = jnp.sum(p, axis=-1, keepdims=True)
    alpha = p / denom                                   # exact divide; denom is (TM,1)

    out = lax.dot_general(alpha.astype(h.dtype), h, (((1,), (0,)), ((), ())),
                          preferred_element_type=jnp.float32)    # (TM, Dp)
    o_ref[...] = out.astype(o_ref.dtype)


def _pick_row_tile(np_pad, score_budget_bytes=8 << 20):
    """Largest TM in {256,128,64,32} dividing Np with the (4*TM, Np) f32 score block
    within budget.  Np is a multiple of 128, so 32 always divides."""
    for tm in (256, 128, 64, 32):
        if np_pad % tm == 0 and 4 * tm * np_pad * 4 <= score_budget_bytes:
            return tm
    return 32


def local_aggregator(hidden, adj, a_params, *, neg_slope=0.2):
    """hidden: (B, N, D) float; adj: (B, N, N) int; a_params: (4, D) float."""
    B, N, D = hidden.shape
    dtype = hidden.dtype
    itemsize = jnp.dtype(dtype).itemsize

    # Pad N and D to multiples of 128 (lane-dense vregs, clean MXU K dim, clean TM).
    Np = _round_up(N, 128)
    Dp = _round_up(D, 128)

    if Np != N or Dp != D:
        hidden_p = jnp.pad(hidden, ((0, 0), (0, Np - N), (0, Dp - D)))
    else:
        hidden_p = hidden
    a_p = (jnp.pad(a_params, ((0, 0), (0, Dp - D))) if Dp != D else a_params).astype(dtype)
    adj_p = jnp.pad(adj, ((0, 0), (0, Np - N), (0, Np - N))) if Np != N else adj
    adj_i8 = adj_p.astype(jnp.int8)                 # values 0..4 -> 4x less HBM traffic

    # Mask row: real masked columns get -9e15 (reference value); padded columns get
    # -1e30 so all-masked rows stay uniform over the real N columns only.
    mask_row = jnp.where(jnp.arange(Np) < N,
                         jnp.float32(-9e15), jnp.float32(-1e30)).reshape(1, Np)

    tm = _pick_row_tile(Np)

    # Per-step VMEM footprint estimate (h & adj & out double-buffered by the pipeline,
    # plus the hk scratch, the (4*TM, Np) f32 score block and select/softmax temps).
    per_step = (2 * Np * Dp * itemsize            # h block
                + 2 * tm * Np * 1                 # adj int8 block
                + 2 * tm * Dp * itemsize          # out block
                + 4 * tm * Dp * itemsize          # hk scratch
                + 4 * tm * Np * 4                 # e scores (f32)
                + 4 * tm * Np * 4                 # att / p / temps headroom
                + (4 << 20))                      # misc slack
    try:
        vmem_cap = pltpu.get_tpu_info().vmem_capacity_bytes
    except Exception:
        vmem_cap = 64 << 20
    vmem_limit = int(max(32 << 20, min(per_step, vmem_cap - (8 << 20))))

    kernel = functools.partial(_local_agg_kernel, neg_slope=neg_slope)
    out = pl.pallas_call(
        kernel,
        out_shape=jax.ShapeDtypeStruct((B, Np, Dp), dtype),
        grid=(B, Np // tm),
        in_specs=[
            pl.BlockSpec((None, Np, Dp), lambda b, i: (b, 0, 0)),   # full keys/values
            pl.BlockSpec((None, tm, Np), lambda b, i: (b, i, 0)),   # adj row block (int8)
            pl.BlockSpec((4, Dp), lambda b, i: (0, 0)),             # attention params
            pl.BlockSpec((1, Np), lambda b, i: (0, 0)),             # column mask row
        ],
        out_specs=pl.BlockSpec((None, tm, Dp), lambda b, i: (b, i, 0)),
        scratch_shapes=[pltpu.VMEM((4 * tm, Dp), dtype)],           # scaled-query operand
        compiler_params=pltpu.CompilerParams(
            dimension_semantics=("parallel", "parallel"),
            vmem_limit_bytes=vmem_limit),
    )(hidden_p, adj_i8, a_p, mask_row)

    if Np != N or Dp != D:
        out = out[:, :N, :D]
    return out


def local_aggregator_ref(hidden, adj, a_params, *, neg_slope=0.2):
    """Pure-JAX reference mirroring the PyTorch forward exactly."""
    h = hidden.astype(jnp.float32)
    a_input = h[:, :, None, :] * h[:, None, :, :]                # (B, N, N, D)

    def lrelu(x):
        return jnp.where(x > 0, x, neg_slope * x)

    es = [lrelu(jnp.einsum('bijd,d->bij', a_input, a_params[k].astype(jnp.float32)))
          for k in range(4)]
    neg = jnp.full_like(es[0], -9e15)
    att = jnp.where(adj == 1, es[0], neg)
    att = jnp.where(adj == 2, es[1], att)
    att = jnp.where(adj == 3, es[2], att)
    att = jnp.where(adj == 4, es[3], att)
    alpha = jax.nn.softmax(att, axis=-1)
    return jnp.einsum('bij,bjd->bid', alpha, h).astype(hidden.dtype)


if __name__ == "__main__":
    B, N, D = 2, 8, 32
    neg_slope = 0.2  # the `alpha` LeakyReLU slope of the PyTorch module

    key = jax.random.PRNGKey(0)
    k_h, k_adj, k_a, k_b = jax.random.split(key, 4)

    hidden = jax.random.normal(k_h, (B, N, D), dtype=jnp.float32)
    adj = jax.random.randint(k_adj, (B, N, N), 0, 5, dtype=jnp.int32)
    # Force one all-masked row to exercise the uniform-softmax edge case under padding.
    adj = adj.at[0, 0, :].set(0)
    # Deterministic xavier-normal-style init for a_0..a_3 (each (D,1)), stacked as (4, D).
    std = (2.0 / (D + 1)) ** 0.5
    a_params = std * jax.random.normal(k_a, (4, D), dtype=jnp.float32)
    # bias parameter exists in __init__ but is unused in forward(); kept for shape fidelity.
    bias = std * jax.random.normal(k_b, (D,), dtype=jnp.float32)  # noqa: F841

    out = local_aggregator(hidden, adj, a_params, neg_slope=neg_slope)
    out = jax.block_until_ready(out)

    ref = local_aggregator_ref(hidden, adj, a_params, neg_slope=neg_slope)
    assert out.shape == (B, N, D)
    assert jnp.allclose(out, ref, atol=1e-4, rtol=1e-4), "mismatch vs reference"

    print("KERNEL_OK")
</pallas_src>

<mosaic_0001>
module attributes {stable_mosaic.version = 11 : i64} {
  func.func @_local_agg_kernel(%arg0: i32, %arg1: i32, %arg2: memref<1x128x128xf32, #tpu.memory_space<vmem>>, %arg3: memref<1x128x128xi8, #tpu.memory_space<vmem>>, %arg4: memref<4x128xf32, #tpu.memory_space<vmem>>, %arg5: memref<1x128xf32, #tpu.memory_space<vmem>>, %arg6: memref<1x128x128xf32, #tpu.memory_space<vmem>>, %arg7: memref<512x128xf32, #tpu.memory_space<vmem>>) attributes {dimension_semantics = [#tpu.dimension_semantics<parallel>, #tpu.dimension_semantics<parallel>], iteration_bounds = array<i64: 2, 1>, scalar_prefetch = 0 : i64, scratch_operands = 1 : i64, tpu.core_type = #tpu.core_type<tc>, window_params = [{transform_indices = @transform_0, window_bounds = array<i64: 1, 128, 128>}, {transform_indices = @transform_1, window_bounds = array<i64: 1, 128, 128>}, {pipeline_mode = #tpu.pipeline_mode<synchronous>, transform_indices = @transform_2, window_bounds = array<i64: 4, 128>}, {pipeline_mode = #tpu.pipeline_mode<synchronous>, transform_indices = @transform_3, window_bounds = array<i64: 1, 128>}, {transform_indices = @transform_4, window_bounds = array<i64: 1, 128, 128>}]} {
    %c128_i32 = arith.constant 128 : i32
    %0 = arith.muli %arg1, %c128_i32 : i32
    %1 = tpu.assume_multiple %0, 128 : i32
    %c0 = arith.constant 0 : index
    %2 = arith.index_cast %1 : i32 to index
    %c0_0 = arith.constant 0 : index
    %3 = vector.load %arg2[%c0, %2, %c0_0] : memref<1x128x128xf32, #tpu.memory_space<vmem>>, vector<1x128x128xf32>
    %4 = vector.shape_cast %3 : vector<1x128x128xf32> to vector<128x128xf32>
    %c0_1 = arith.constant 0 : index
    %c0_2 = arith.constant 0 : index
    %5 = vector.load %arg4[%c0_1, %c0_2] : memref<4x128xf32, #tpu.memory_space<vmem>>, vector<4x128xf32>
    %6 = vector.extract_strided_slice %5 {offsets = [0, 0], sizes = [1, 128], strides = [1, 1]} : vector<4x128xf32> to vector<1x128xf32>
    %7 = vector.broadcast %6 : vector<1x128xf32> to vector<128x128xf32>
    %8 = arith.mulf %4, %7 : vector<128x128xf32>
    %c0_3 = arith.constant 0 : index
    %c0_4 = arith.constant 0 : index
    %9 = vector.load %arg7[%c0_3, %c0_4] : memref<512x128xf32, #tpu.memory_space<vmem>>, vector<128x128xf32>
    tpu.vector_store %arg7[%c0_3, %c0_4], %8 {strides = array<i32>} : memref<512x128xf32, #tpu.memory_space<vmem>>, vector<128x128xf32>,
    %10 = vector.extract_strided_slice %5 {offsets = [1, 0], sizes = [1, 128], strides = [1, 1]} : vector<4x128xf32> to vector<1x128xf32>
    %11 = vector.broadcast %10 : vector<1x128xf32> to vector<128x128xf32>
    %12 = arith.mulf %4, %11 : vector<128x128xf32>
    %c128 = arith.constant 128 : index
    %c0_5 = arith.constant 0 : index
    %13 = vector.load %arg7[%c128, %c0_5] : memref<512x128xf32, #tpu.memory_space<vmem>>, vector<128x128xf32>
    tpu.vector_store %arg7[%c128, %c0_5], %12 {strides = array<i32>} : memref<512x128xf32, #tpu.memory_space<vmem>>, vector<128x128xf32>,
    %14 = vector.extract_strided_slice %5 {offsets = [2, 0], sizes = [1, 128], strides = [1, 1]} : vector<4x128xf32> to vector<1x128xf32>
    %15 = vector.broadcast %14 : vector<1x128xf32> to vector<128x128xf32>
    %16 = arith.mulf %4, %15 : vector<128x128xf32>
    %c256 = arith.constant 256 : index
    %c0_6 = arith.constant 0 : index
    %17 = vector.load %arg7[%c256, %c0_6] : memref<512x128xf32, #tpu.memory_space<vmem>>, vector<128x128xf32>
    tpu.vector_store %arg7[%c256, %c0_6], %16 {strides = array<i32>} : memref<512x128xf32, #tpu.memory_space<vmem>>, vector<128x128xf32>,
    %18 = vector.extract_strided_slice %5 {offsets = [3, 0], sizes = [1, 128], strides = [1, 1]} : vector<4x128xf32> to vector<1x128xf32>
    %19 = vector.broadcast %18 : vector<1x128xf32> to vector<128x128xf32>
    %20 = arith.mulf %4, %19 : vector<128x128xf32>
    %c384 = arith.constant 384 : index
    %c0_7 = arith.constant 0 : index
    %21 = vector.load %arg7[%c384, %c0_7] : memref<512x128xf32, #tpu.memory_space<vmem>>, vector<128x128xf32>
    tpu.vector_store %arg7[%c384, %c0_7], %20 {strides = array<i32>} : memref<512x128xf32, #tpu.memory_space<vmem>>, vector<128x128xf32>,
    %c0_8 = arith.constant 0 : index
    %c0_9 = arith.constant 0 : index
    %c0_10 = arith.constant 0 : index
    %22 = vector.load %arg2[%c0_8, %c0_9, %c0_10] : memref<1x128x128xf32, #tpu.memory_space<vmem>>, vector<1x128x128xf32>
    %23 = vector.shape_cast %22 : vector<1x128x128xf32> to vector<128x128xf32>
    %c0_11 = arith.constant 0 : index
    %c0_12 = arith.constant 0 : index
    %24 = vector.load %arg7[%c0_11, %c0_12] : memref<512x128xf32, #tpu.memory_space<vmem>>, vector<512x128xf32>
    %cst = arith.constant dense<0.000000e+00> : vector<512x128xf32>
    %25 = tpu.matmul %24, %23, %cst {dimension_numbers = #tpu.dot_dimension_numbers<[1], [1], [0], [0], [0, 0, 1, 0], [], []>} : vector<512x128xf32>, vector<128x128xf32>, vector<512x128xf32> -> vector<512x128xf32>
    %c0_13 = arith.constant 0 : index
    %c0_14 = arith.constant 0 : index
    %c0_15 = arith.constant 0 : index
    %26 = vector.load %arg3[%c0_13, %c0_14, %c0_15] : memref<1x128x128xi8, #tpu.memory_space<vmem>>, vector<1x128x128xi8>
    %27 = vector.shape_cast %26 : vector<1x128x128xi8> to vector<128x128xi8>
    %28 = arith.extsi %27 : vector<128x128xi8> to vector<128x128xi32>
    %c0_16 = arith.constant 0 : index
    %c0_17 = arith.constant 0 : index
    %29 = vector.load %arg5[%c0_16, %c0_17] : memref<1x128xf32, #tpu.memory_space<vmem>>, vector<1x128xf32>
    %30 = vector.shape_cast %29 : vector<1x128xf32> to vector<1x128xf32>
    %31 = vector.broadcast %30 : vector<1x128xf32> to vector<128x128xf32>
    %c1_i32 = arith.constant 1 : i32
    %32 = vector.broadcast %c1_i32 : i32 to vector<128x128xi32>
    %33 = arith.cmpi eq, %28, %32 : vector<128x128xi32>
    %34 = vector.extract_strided_slice %25 {offsets = [0, 0], sizes = [128, 128], strides = [1, 1]} : vector<512x128xf32> to vector<128x128xf32>
    %35 = arith.select %33, %34, %31 : vector<128x128xi1>, vector<128x128xf32>
    %c2_i32 = arith.constant 2 : i32
    %36 = vector.broadcast %c2_i32 : i32 to vector<128x128xi32>
    %37 = arith.cmpi eq, %28, %36 : vector<128x128xi32>
    %38 = vector.extract_strided_slice %25 {offsets = [128, 0], sizes = [128, 128], strides = [1, 1]} : vector<512x128xf32> to vector<128x128xf32>
    %39 = arith.select %37, %38, %35 : vector<128x128xi1>, vector<128x128xf32>
    %c3_i32 = arith.constant 3 : i32
    %40 = vector.broadcast %c3_i32 : i32 to vector<128x128xi32>
    %41 = arith.cmpi eq, %28, %40 : vector<128x128xi32>
    %42 = vector.extract_strided_slice %25 {offsets = [256, 0], sizes = [128, 128], strides = [1, 1]} : vector<512x128xf32> to vector<128x128xf32>
    %43 = arith.select %41, %42, %39 : vector<128x128xi1>, vector<128x128xf32>
    %c4_i32 = arith.constant 4 : i32
    %44 = vector.broadcast %c4_i32 : i32 to vector<128x128xi32>
    %45 = arith.cmpi eq, %28, %44 : vector<128x128xi32>
    %46 = vector.extract_strided_slice %25 {offsets = [384, 0], sizes = [128, 128], strides = [1, 1]} : vector<512x128xf32> to vector<128x128xf32>
    %47 = arith.select %45, %46, %43 : vector<128x128xi1>, vector<128x128xf32>
    %cst_18 = arith.constant 0.000000e+00 : f32
    %48 = vector.broadcast %cst_18 : f32 to vector<128x128xf32>
    %49 = arith.cmpf ogt, %47, %48 : vector<128x128xf32>
    %cst_19 = arith.constant 2.000000e-01 : f32
    %50 = vector.broadcast %cst_19 : f32 to vector<128x128xf32>
    %51 = arith.mulf %50, %47 : vector<128x128xf32>
    %52 = arith.select %49, %47, %51 : vector<128x128xi1>, vector<128x128xf32>
    %cst_20 = arith.constant dense<0xFF800000> : vector<128xf32>
    %53 = vector.multi_reduction <maximumf>, %52, %cst_20 [1] : vector<128x128xf32> to vector<128xf32>
    %54 = vector.shape_cast %53 : vector<128xf32> to vector<128x1xf32>
    %55 = vector.broadcast %54 : vector<128x1xf32> to vector<128x128xf32>
    %56 = arith.subf %52, %55 : vector<128x128xf32>
    %57 = math.exp %56 : vector<128x128xf32>
    %cst_21 = arith.constant dense<0.000000e+00> : vector<128xf32>
    %58 = vector.multi_reduction <add>, %57, %cst_21 [1] : vector<128x128xf32> to vector<128xf32>
    %59 = vector.shape_cast %58 : vector<128xf32> to vector<128x1xf32>
    %60 = vector.broadcast %59 : vector<128x1xf32> to vector<128x128xf32>
    %61 = arith.divf %57, %60 : vector<128x128xf32>
    %cst_22 = arith.constant dense<0.000000e+00> : vector<128x128xf32>
    %62 = tpu.matmul %61, %23, %cst_22 {dimension_numbers = #tpu.dot_dimension_numbers<[1], [0], [0], [1], [0, 0, 1, 1], [], []>} : vector<128x128xf32>, vector<128x128xf32>, vector<128x128xf32> -> vector<128x128xf32>
    %c0_23 = arith.constant 0 : index
    %c0_24 = arith.constant 0 : index
    %c0_25 = arith.constant 0 : index
    %63 = vector.load %arg6[%c0_23, %c0_24, %c0_25] : memref<1x128x128xf32, #tpu.memory_space<vmem>>, vector<1x128x128xf32>
    %64 = vector.shape_cast %63 : vector<1x128x128xf32> to vector<128x128xf32>
    %65 = vector.shape_cast %62 : vector<128x128xf32> to vector<1x128x128xf32>
    tpu.vector_store %arg6[%c0_23, %c0_24, %c0_25], %65 {strides = array<i32>} : memref<1x128x128xf32, #tpu.memory_space<vmem>>, vector<1x128x128xf32>,
    return
  }
  func.func @transform_0(%arg0: i32, %arg1: i32) -> (i32, i32, i32) {
    %c0_i32 = arith.constant 0 : i32
    %c0_i32_0 = arith.constant 0 : i32
    %c0_i32_1 = arith.constant 0 : i32
    return %arg0, %c0_i32, %c0_i32_0 : i32, i32, i32
  }
  func.func @transform_1(%arg0: i32, %arg1: i32) -> (i32, i32, i32) {
    %c0_i32 = arith.constant 0 : i32
    %c0_i32_0 = arith.constant 0 : i32
    return %arg0, %arg1, %c0_i32 : i32, i32, i32
  }
  func.func @transform_2(%arg0: i32, %arg1: i32) -> (i32, i32) {
    %c0_i32 = arith.constant 0 : i32
    %c0_i32_0 = arith.constant 0 : i32
    %c0_i32_1 = arith.constant 0 : i32
    return %c0_i32, %c0_i32_0 : i32, i32
  }
  func.func @transform_3(%arg0: i32, %arg1: i32) -> (i32, i32) {
    %c0_i32 = arith.constant 0 : i32
    %c0_i32_0 = arith.constant 0 : i32
    %c0_i32_1 = arith.constant 0 : i32
    return %c0_i32, %c0_i32_0 : i32, i32
  }
  func.func @transform_4(%arg0: i32, %arg1: i32) -> (i32, i32, i32) {
    %c0_i32 = arith.constant 0 : i32
    %c0_i32_0 = arith.constant 0 : i32
    return %arg0, %arg1, %c0_i32 : i32, i32, i32
  }
}

</mosaic_0001>

<llo_original>
// kernel: tpu_custom_call.1
$region0: #{tpu_custom_call.1}
  #allocation0 [shape = 'u32[]', space=smem, size = 0x4, offset = 0x4, fixed_abs, tag = 'smem constant byte address 0x4 - core index']
  #allocation1 [shape = 'u32[144,128]{1,0:T(1,128)}', space=vmem, size = 0x12000, scoped, tag = 'internal scratch']
  #allocation2 [shape = 'f32[512,128]{1,0:T(8,128)}', space=vmem, size = 0x40000, scoped, tag = 'scratch operand']
  %s0 = inlined_call_operand.hbm [shape: f32[2,128,128], index: 0, kind: input, shape index: {}]
  %s1 = inlined_call_operand.hbm [shape: s8[2,128,128], index: 1, kind: input, shape index: {}]
  %s2 = inlined_call_operand.vmem [shape: f32[4,128], index: 2, kind: input, shape index: {}]
  %s3 = inlined_call_operand.vmem [shape: f32[1,128], index: 3, kind: input, shape index: {}]
  %s4 = inlined_call_operand.hbm [shape: f32[2,128,128], index: 4, kind: output, shape index: {}]
  %s5 = sld [smem:[#allocation0]]
  $region57: #{tpu_custom_call.1} parent=0
    _
  %s7 = ssub.s32 1, %s5
  %s8 = scalar_select 0, %s7, %s5
  $region1: #{tpu_custom_call.1} parent=0
    #allocation3 [shape = 'u8[131072]{0}', space=vmem, size = 0x20000, scoped, tag = 'input window, operand 0']
    #allocation4 [shape = 's32[2]{0}', space=sflag, size = 0x8, scoped, tag = 'scoped memory for tpu_custom_call.1']
    #allocation5 [shape = 's32[2]{0}', space=sflag, size = 0x8, scoped, tag = 'scoped memory for tpu_custom_call.1']
    #allocation6 [shape = 'u8[32768]{0}', space=vmem, size = 0x8000, scoped, tag = 'input window, operand 1']
    #allocation7 [shape = 's32[2]{0}', space=sflag, size = 0x8, scoped, tag = 'scoped memory for tpu_custom_call.1']
    #allocation8 [shape = 'u8[131072]{0}', space=vmem, size = 0x20000, scoped, tag = 'output window, operand 0']
    %9 = vsyncpa [#allocation4], 0
    %s10 = scalar_lea.sflag [#allocation4], 1
    %11 = vsyncpa %s10, 0
    %12 = vsyncpa [#allocation7], 0
    %s13 = scalar_lea.sflag [#allocation7], 1
    %14 = vsyncpa %s13, 0
    %15 = vsyncpa [#allocation5], 0
    %s16 = scalar_lea.sflag [#allocation5], 1
    %17 = vsyncpa %s16, 0
    loop: start=0, step=1, limit=4
    $region2: #{tpu_custom_call.1} parent=1 // loop_pre_header
      _
    $region3: #{tpu_custom_call.1} parent=1 // loop_header
      %s19 = sphi 0, %s23
      %p20 = scmp.ge.s32.totalorder %s19, 4
      %s26 = sphi 0, %s38
      %s27 = sphi 0, %s34
      %s28 = sphi 0, %s26
      %s29 = sphi 0, %s27
      %s30 = sphi 0, %s28
      %s31 = sphi 0, %s29
      %s41 = sphi 0, %s43
      %s44 = sphi 0, %s41
      %s45 = sphi 0, %s44
      %s61 = sphi 0, %s45
      %s69 = sphi 0, %s71
      %s72 = sphi 0, %s69
      %s73 = sphi 0, %s72
      %s89 = sphi 0, %s73
      %s93 = sphi 0, %s93
      %s95 = sphi 0, %s93
      %s96 = sphi 0, %s95
      %s110 = sphi 0, %s96
      %s114 = sphi 0, %s114
      %s116 = sphi 0, %s114
      %s117 = sphi 0, %s116
      %s131 = sphi 0, %s117
      %s139 = sphi 0, %s141
      %s142 = sphi 0, %s139
      %s143 = sphi 0, %s142
      %s159 = sphi 0, %s143
    $region4: #{tpu_custom_call.1} parent=1 // loop_header_branch
      %22 = sbr.rel (%p20) target = $region8
    $region5: #{tpu_custom_call.1} parent=1 // loop_body
      %s24 = ssub.s32 %s19, 1
      %s25 = ssub.s32 %s19, 2
      %s32 = sadd.s32 1, %s27
      %p33 = scmp.ge.s32.totalorder %s32, 1
      %s34 = scalar_select %p33, 0, %s32
      %s35 = sadd.s32 1, %s26
      %s36 = scalar_select %p33, %s35, %s26
      %p37 = scmp.ge.s32.totalorder %s36, 2
      %s38 = scalar_select %p37, 0, %s36
      %s39 = ssub.s32 %s26, %s38
      %p40 = scmp.eq.s32.totalorder %s39, 0
      %s42 = sadd.s32 %s41, 1
      %s43 = scalar_select %p40, %s41, %s42
      %p46 = pneg %p40
      %p47 = scmp.eq.s32.totalorder %s19, 1
      %p48 = por %p46, %p47
      %p49 = scmp.ne.s32.totalorder %s41, %s44
      %p50 = scmp.eq.s32.totalorder %s19, 0
      %p51 = por %p49, %p50
      %p52 = scmp.ne.s32.totalorder %s41, %s44
      %p53 = scmp.eq.s32.totalorder %s24, 1
      %p54 = por %p52, %p53
      %p55 = scmp.ne.s32.totalorder %s44, %s45
      %p56 = scmp.eq.s32.totalorder %s24, 0
      %p57 = por %p55, %p56
      %p58 = scmp.ne.s32.totalorder %s44, %s45
      %p59 = scmp.eq.s32.totalorder %s25, 1
      %p60 = por %p58, %p59
      %p62 = scmp.ne.s32.totalorder %s45, %s61
      %p63 = scmp.eq.s32.totalorder %s25, 0
      %p64 = por %p62, %p63
      %s65 = ssub.s32 %s26, %s38
      %s66 = ssub.s32 %s27, %s34
      %s67 = sor.u32 %s65, %s66
      %p68 = scmp.eq.s32.totalorder %s67, 0
      %s70 = sadd.s32 %s69, 1
      %s71 = scalar_select %p68, %s69, %s70
      %p74 = pneg %p68
      %p75 = scmp.eq.s32.totalorder %s19, 1
      %p76 = por %p74, %p75
      %p77 = scmp.ne.s32.totalorder %s69, %s72
      %p78 = scmp.eq.s32.totalorder %s19, 0
      %p79 = por %p77, %p78
      %p80 = scmp.ne.s32.totalorder %s69, %s72
      %p81 = scmp.eq.s32.totalorder %s24, 1
      %p82 = por %p80, %p81
      %p83 = scmp.ne.s32.totalorder %s72, %s73
      %p84 = scmp.eq.s32.totalorder %s24, 0
      %p85 = por %p83, %p84
      %p86 = scmp.ne.s32.totalorder %s72, %s73
      %p87 = scmp.eq.s32.totalorder %s25, 1
      %p88 = por %p86, %p87
      %p90 = scmp.ne.s32.totalorder %s73, %s89
      %p91 = scmp.eq.s32.totalorder %s25, 0
      %p92 = por %p90, %p91
      %s94 = sadd.s32 %s93, 1
      %p97 = scmp.eq.s32.totalorder %s19, 1
      %p98 = scmp.ne.s32.totalorder %s93, %s95
      %p99 = scmp.eq.s32.totalorder %s19, 0
      %p100 = por %p98, %p99
      %p101 = scmp.ne.s32.totalorder %s93, %s95
      %p102 = scmp.eq.s32.totalorder %s24, 1
      %p103 = por %p101, %p102
      %p104 = scmp.ne.s32.totalorder %s95, %s96
      %p105 = scmp.eq.s32.totalorder %s24, 0
      %p106 = por %p104, %p105
      %p107 = scmp.ne.s32.totalorder %s95, %s96
      %p108 = scmp.eq.s32.totalorder %s25, 1
      %p109 = por %p107, %p108
      %p111 = scmp.ne.s32.totalorder %s96, %s110
      %p112 = scmp.eq.s32.totalorder %s25, 0
      %p113 = por %p111, %p112
      %s115 = sadd.s32 %s114, 1
      %p118 = scmp.eq.s32.totalorder %s19, 1
      %p119 = scmp.ne.s32.totalorder %s114, %s116
      %p120 = scmp.eq.s32.totalorder %s19, 0
      %p121 = por %p119, %p120
      %p122 = scmp.ne.s32.totalorder %s114, %s116
      %p123 = scmp.eq.s32.totalorder %s24, 1
      %p124 = por %p122, %p123
      %p125 = scmp.ne.s32.totalorder %s116, %s117
      %p126 = scmp.eq.s32.totalorder %s24, 0
      %p127 = por %p125, %p126
      %p128 = scmp.ne.s32.totalorder %s116, %s117
      %p129 = scmp.eq.s32.totalorder %s25, 1
      %p130 = por %p128, %p129
      %p132 = scmp.ne.s32.totalorder %s117, %s131
      %p133 = scmp.eq.s32.totalorder %s25, 0
      %p134 = por %p132, %p133
      %s135 = ssub.s32 %s26, %s38
      %s136 = ssub.s32 %s27, %s34
      %s137 = sor.u32 %s135, %s136
      %p138 = scmp.eq.s32.totalorder %s137, 0
      %s140 = sadd.s32 %s139, 1
      %s141 = scalar_select %p138, %s139, %s140
      %p144 = pneg %p138
      %p145 = scmp.eq.s32.totalorder %s19, 1
      %p146 = por %p144, %p145
      %p147 = scmp.ne.s32.totalorder %s139, %s142
      %p148 = scmp.eq.s32.totalorder %s19, 0
      %p149 = por %p147, %p148
      %p150 = scmp.ne.s32.totalorder %s139, %s142
      %p151 = scmp.eq.s32.totalorder %s24, 1
      %p152 = por %p150, %p151
      %p153 = scmp.ne.s32.totalorder %s142, %s143
      %p154 = scmp.eq.s32.totalorder %s24, 0
      %p155 = por %p153, %p154
      %p156 = scmp.ne.s32.totalorder %s142, %s143
      %p157 = scmp.eq.s32.totalorder %s25, 1
      %p158 = por %p156, %p157
      %p160 = scmp.ne.s32.totalorder %s143, %s159
      %p161 = scmp.eq.s32.totalorder %s25, 0
      %p162 = por %p160, %p161
      %p163 = scmp.le.s32.totalorder 1, %s19
      %p164 = scmp.lt.s32.totalorder %s19, 3
      %p165 = pnand %p163, %p164
      %p166 = pneg %p165
      // Predicated region
      $region9: #{tpu_custom_call.1} parent=5 // pred_check
        _
      $region10: #{tpu_custom_call.1} parent=5 // pred_check_branch
        %168 = sbr.rel (%p165) target = $region12
      $region11: #{tpu_custom_call.1} parent=5 // pred_region
        %s169 = ssub.s32 %s19, 1
        // Predicated region
        $region13: #{tpu_custom_call.1} parent=11 // pred_check
          %p170 = pneg %p106
        $region14: #{tpu_custom_call.1} parent=11 // pred_check_branch
          %172 = sbr.rel (%p170) target = $region16
        $region15: #{tpu_custom_call.1} parent=11 // pred_region
          _
        $region16: #{tpu_custom_call.1} parent=11 // pred_fallthru
          _
        // Predicated region
        $region17: #{tpu_custom_call.1} parent=11 // pred_check
          %p173 = pneg %p127
        $region18: #{tpu_custom_call.1} parent=11 // pred_check_branch
          %175 = sbr.rel (%p173) target = $region20
        $region19: #{tpu_custom_call.1} parent=11 // pred_region
          _
        $region20: #{tpu_custom_call.1} parent=11 // pred_fallthru
          _
      $region12: #{tpu_custom_call.1} parent=5 // pred_fallthru
        _
      %p176 = scmp.lt.s32.totalorder %s19, 2
      // Predicated region
      $region21: #{tpu_custom_call.1} parent=5 // pred_check
        %p177 = pneg %p176
      $region22: #{tpu_custom_call.1} parent=5 // pred_check_branch
        %179 = sbr.rel (%p177) target = $region24
      $region23: #{tpu_custom_call.1} parent=5 // pred_region
        // Predicated region
        $region25: #{tpu_custom_call.1} parent=23 // pred_check
          %p180 = pneg %p51
        $region26: #{tpu_custom_call.1} parent=23 // pred_check_branch
          %182 = sbr.rel (%p180) target = $region28
        $region27: #{tpu_custom_call.1} parent=23 // pred_region
          %s183 = sand.u32 %s41, 1
          %s184 = scalar_lea.sflag [#allocation4], %s183
          %s185 = sand.u32 %s41, 1
          %s186 = smul.addr %s185, 128
          %s187 = scalar_lea.vmem [#allocation3], %s186
          %s189 = ssub.s32 2048, 2048
          %190 = vsyncadd %s184, %s189
          %s191 = smul.addr %s26, 16
          %s192 = smul.addr %s191, 128
          %s193 = scalar_lea.hbm %s0, %s192
          %s194 = sshll.u32 %s187, 4
          %s195 = int_to_ptr.vmem [resolvable:$true] %s194
          %200 = dma.hbm_to_vmem [thread:$0]  %s193, 2048, %s195, %s184, 128, 128, 8
        $region28: #{tpu_custom_call.1} parent=23 // pred_fallthru
          _
        // Predicated region
        $region29: #{tpu_custom_call.1} parent=23 // pred_check
          %p201 = pneg %p79
        $region30: #{tpu_custom_call.1} parent=23 // pred_check_branch
          %203 = sbr.rel (%p201) target = $region32
        $region31: #{tpu_custom_call.1} parent=23 // pred_region
          %s204 = sand.u32 %s69, 1
          %s205 = scalar_lea.sflag [#allocation7], %s204
          %s206 = sand.u32 %s69, 1
          %s207 = smul.addr %s206, 32
          %s208 = scalar_lea.vmem [#allocation6], %s207
          %s209 = smul.u32 4, %s27
          %s211 = ssub.s32 512, 512
          %212 = vsyncadd %s205, %s211
          %s213 = smul.addr %s26, 4
          %s214 = sadd.s32 %s209, %s213
          %s215 = smul.addr %s214, 128
          %s216 = scalar_lea.hbm %s1, %s215
          %s217 = sshll.u32 %s208, 4
          %s218 = int_to_ptr.vmem [resolvable:$true] %s217
          %223 = dma.hbm_to_vmem [thread:$0]  %s216, 512, %s218, %s205, 128, 128, 8
        $region32: #{tpu_custom_call.1} parent=23 // pred_fallthru
          _
      $region24: #{tpu_custom_call.1} parent=5 // pred_fallthru
        _
      %p224 = scmp.le.s32.totalorder 1, %s19
      %p225 = scmp.lt.s32.totalorder %s19, 3
      %p226 = pnand %p224, %p225
      %p227 = pneg %p226
      // Predicated region
      $region33: #{tpu_custom_call.1} parent=5 // pred_check
        _
      $region34: #{tpu_custom_call.1} parent=5 // pred_check_branch
        %229 = sbr.rel (%p226) target = $region36
      $region35: #{tpu_custom_call.1} parent=5 // pred_region
        %s230 = ssub.s32 %s19, 1
        %s231 = sand.u32 %s44, 1
        %s232 = scalar_lea.sflag [#allocation4], %s231
        %s233 = sand.u32 %s44, 1
        %s234 = smul.addr %s233, 128
        %s235 = scalar_lea.vmem [#allocation3], %s234
        // Predicated region
        $region37: #{tpu_custom_call.1} parent=35 // pred_check
          %p236 = pneg %p57
        $region38: #{tpu_custom_call.1} parent=35 // pred_check_branch
          %238 = sbr.rel (%p236) target = $region40
        $region39: #{tpu_custom_call.1} parent=35 // pred_region
          %239 = dma.done %s232, 2048
        $region40: #{tpu_custom_call.1} parent=35 // pred_fallthru
          _
        %s240 = sand.u32 %s72, 1
        %s241 = scalar_lea.sflag [#allocation7], %s240
        %s242 = sand.u32 %s72, 1
        %s243 = smul.addr %s242, 32
        %s244 = scalar_lea.vmem [#allocation6], %s243
        // Predicated region
        $region41: #{tpu_custom_call.1} parent=35 // pred_check
          %p245 = pneg %p85
        $region42: #{tpu_custom_call.1} parent=35 // pred_check_branch
          %247 = sbr.rel (%p245) target = $region44
        $region43: #{tpu_custom_call.1} parent=35 // pred_region
          %248 = dma.done %s241, 512
        $region44: #{tpu_custom_call.1} parent=35 // pred_fallthru
          _
        %s249 = sand.u32 %s44, 1
        %s250 = scalar_lea.sflag [#allocation4], %s249
        %s251 = sand.u32 %s44, 1
        %s252 = smul.addr %s251, 128
        %s253 = scalar_lea.vmem [#allocation3], %s252
        %p254 = pneg %p57
        %p255 = pneg %p54
        %s256 = sand.u32 %s72, 1
        %s257 = scalar_lea.sflag [#allocation7], %s256
        %s258 = sand.u32 %s72, 1
        %s259 = smul.addr %s258, 32
        %s260 = scalar_lea.vmem [#allocation6], %s259
        %p261 = pneg %p85
        %p262 = pneg %p82
        %p263 = pneg %p106
        %p264 = pneg %p103
        %p265 = pneg %p127
        %p266 = pneg %p124
        %p267 = pneg %p155
        %p268 = pneg %p152
        %s269 = sand.u32 %s142, 1
        %s270 = scalar_lea.sflag [#allocation5], %s269
        %s271 = sand.u32 %s142, 1
        %s272 = smul.addr %s271, 128
        %s273 = scalar_lea.vmem [#allocation8], %s272
        %s274 = smul.u32 4, %s29
        %s275 = smul.u32 16, %s29
        %s276 = smul.u32 %s29, 128
        %s277 = scalar_lea.vmem %s235, %s276 [#allocation3]
        %v278 = vld [vmem:[%s277] sm:$0xff]
        %v279 = vld [vmem:[%s277 + $0x8] sm:$0xff]
        %v280 = vld [vmem:[%s277 + $0x10] sm:$0xff]
        %v281 = vld [vmem:[%s277 + $0x18] sm:$0xff]
        %v282 = vld [vmem:[%s277 + $0x20] sm:$0xff]
        %v283 = vld [vmem:[%s277 + $0x28] sm:$0xff]
        %v284 = vld [vmem:[%s277 + $0x30] sm:$0xff]
        %v285 = vld [vmem:[%s277 + $0x38] sm:$0xff]
        %v286 = vld [vmem:[%s277 + $0x40] sm:$0xff]
        %v287 = vld [vmem:[%s277 + $0x48] sm:$0xff]
        %v288 = vld [vmem:[%s277 + $0x50] sm:$0xff]
        %v289 = vld [vmem:[%s277 + $0x58] sm:$0xff]
        %v290 = vld [vmem:[%s277 + $0x60] sm:$0xff]
        %v291 = vld [vmem:[%s277 + $0x68] sm:$0xff]
        %v292 = vld [vmem:[%s277 + $0x70] sm:$0xff]
        %v293 = vld [vmem:[%s277 + $0x78] sm:$0xff]
        %v294 = vld [vmem:[%s2] sm:$0xf]
        %v295 = vlaneseq
        %v296 = vshrl.u32 %v295, 7
        %v297 = vsub.s32 0, %v296
        %v298 = vrot.slane %v294, %v297
        %v299 = vmul.f32 %v278, %v298
        %v300 = vmul.f32 %v279, %v298
        %v301 = vmul.f32 %v280, %v298
        %v302 = vmul.f32 %v281, %v298
        %v303 = vmul.f32 %v282, %v298
        %v304 = vmul.f32 %v283, %v298
        %v305 = vmul.f32 %v284, %v298
        %v306 = vmul.f32 %v285, %v298
        %v307 = vmul.f32 %v286, %v298
        %v308 = vmul.f32 %v287, %v298
        %v309 = vmul.f32 %v288, %v298
        %v310 = vmul.f32 %v289, %v298
        %v311 = vmul.f32 %v290, %v298
        %v312 = vmul.f32 %v291, %v298
        %v313 = vmul.f32 %v292, %v298
        %v314 = vmul.f32 %v293, %v298
        %315 = vst [vmem:[#allocation2] sm:$0xff] %v299
        %316 = vst [vmem:[#allocation2 + $0x8] sm:$0xff] %v300
        %317 = vst [vmem:[#allocation2 + $0x10] sm:$0xff] %v301
        %318 = vst [vmem:[#allocation2 + $0x18] sm:$0xff] %v302
        %319 = vst [vmem:[#allocation2 + $0x20] sm:$0xff] %v303
        %320 = vst [vmem:[#allocation2 + $0x28] sm:$0xff] %v304
        %321 = vst [vmem:[#allocation2 + $0x30] sm:$0xff] %v305
        %322 = vst [vmem:[#allocation2 + $0x38] sm:$0xff] %v306
        %323 = vst [vmem:[#allocation2 + $0x40] sm:$0xff] %v307
        %324 = vst [vmem:[#allocation2 + $0x48] sm:$0xff] %v308
        %325 = vst [vmem:[#allocation2 + $0x50] sm:$0xff] %v309
        %326 = vst [vmem:[#allocation2 + $0x58] sm:$0xff] %v310
        %327 = vst [vmem:[#allocation2 + $0x60] sm:$0xff] %v311
        %328 = vst [vmem:[#allocation2 + $0x68] sm:$0xff] %v312
        %329 = vst [vmem:[#allocation2 + $0x70] sm:$0xff] %v313
        %330 = vst [vmem:[#allocation2 + $0x78] sm:$0xff] %v314
        %v331 = vlaneseq
        %v332 = vshrl.u32 %v331, 7
        %v333 = vsub.s32 1, %v332
        %v334 = vrot.slane %v294, %v333
        %v335 = vmul.f32 %v278, %v334
        %v336 = vmul.f32 %v279, %v334
        %v337 = vmul.f32 %v280, %v334
        %v338 = vmul.f32 %v281, %v334
        %v339 = vmul.f32 %v282, %v334
        %v340 = vmul.f32 %v283, %v334
        %v341 = vmul.f32 %v284, %v334
        %v342 = vmul.f32 %v285, %v334
        %v343 = vmul.f32 %v286, %v334
        %v344 = vmul.f32 %v287, %v334
        %v345 = vmul.f32 %v288, %v334
        %v346 = vmul.f32 %v289, %v334
        %v347 = vmul.f32 %v290, %v334
        %v348 = vmul.f32 %v291, %v334
        %v349 = vmul.f32 %v292, %v334
        %v350 = vmul.f32 %v293, %v334
        %351 = vst [vmem:[#allocation2 + $0x80] sm:$0xff] %v335
        %352 = vst [vmem:[#allocation2 + $0x88] sm:$0xff] %v336
        %353 = vst [vmem:[#allocation2 + $0x90] sm:$0xff] %v337
        %354 = vst [vmem:[#allocation2 + $0x98] sm:$0xff] %v338
        %355 = vst [vmem:[#allocation2 + $0xa0] sm:$0xff] %v339
        %356 = vst [vmem:[#allocation2 + $0xa8] sm:$0xff] %v340
        %357 = vst [vmem:[#allocation2 + $0xb0] sm:$0xff] %v341
        %358 = vst [vmem:[#allocation2 + $0xb8] sm:$0xff] %v342
        %359 = vst [vmem:[#allocation2 + $0xc0] sm:$0xff] %v343
        %360 = vst [vmem:[#allocation2 + $0xc8] sm:$0xff] %v344
        %361 = vst [vmem:[#allocation2 + $0xd0] sm:$0xff] %v345
        %362 = vst [vmem:[#allocation2 + $0xd8] sm:$0xff] %v346
        %363 = vst [vmem:[#allocation2 + $0xe0] sm:$0xff] %v347
        %364 = vst [vmem:[#allocation2 + $0xe8] sm:$0xff] %v348
        %365 = vst [vmem:[#allocation2 + $0xf0] sm:$0xff] %v349
        %366 = vst [vmem:[#allocation2 + $0xf8] sm:$0xff] %v350
        %v367 = vlaneseq
        %v368 = vshrl.u32 %v367, 7
        %v369 = vsub.s32 2, %v368
        %v370 = vrot.slane %v294, %v369
        %v371 = vmul.f32 %v278, %v370
        %v372 = vmul.f32 %v279, %v370
        %v373 = vmul.f32 %v280, %v370
        %v374 = vmul.f32 %v281, %v370
        %v375 = vmul.f32 %v282, %v370
        %v376 = vmul.f32 %v283, %v370
        %v377 = vmul.f32 %v284, %v370
        %v378 = vmul.f32 %v285, %v370
        %v379 = vmul.f32 %v286, %v370
        %v380 = vmul.f32 %v287, %v370
        %v381 = vmul.f32 %v288, %v370
        %v382 = vmul.f32 %v289, %v370
        %v383 = vmul.f32 %v290, %v370
        %v384 = vmul.f32 %v291, %v370
        %v385 = vmul.f32 %v292, %v370
        %v386 = vmul.f32 %v293, %v370
        %387 = vst [vmem:[#allocation2 + $0x100] sm:$0xff] %v371
        %388 = vst [vmem:[#allocation2 + $0x108] sm:$0xff] %v372
        %389 = vst [vmem:[#allocation2 + $0x110] sm:$0xff] %v373
        %390 = vst [vmem:[#allocation2 + $0x118] sm:$0xff] %v374
        %391 = vst [vmem:[#allocation2 + $0x120] sm:$0xff] %v375
        %392 = vst [vmem:[#allocation2 + $0x128] sm:$0xff] %v376
        %393 = vst [vmem:[#allocation2 + $0x130] sm:$0xff] %v377
        %394 = vst [vmem:[#allocation2 + $0x138] sm:$0xff] %v378
        %395 = vst [vmem:[#allocation2 + $0x140] sm:$0xff] %v379
        %396 = vst [vmem:[#allocation2 + $0x148] sm:$0xff] %v380
        %397 = vst [vmem:[#allocation2 + $0x150] sm:$0xff] %v381
        %398 = vst [vmem:[#allocation2 + $0x158] sm:$0xff] %v382
        %399 = vst [vmem:[#allocation2 + $0x160] sm:$0xff] %v383
        %400 = vst [vmem:[#allocation2 + $0x168] sm:$0xff] %v384
        %401 = vst [vmem:[#allocation2 + $0x170] sm:$0xff] %v385
        %402 = vst [vmem:[#allocation2 + $0x178] sm:$0xff] %v386
        %v403 = vlaneseq
        %v404 = vshrl.u32 %v403, 7
        %v405 = vsub.s32 3, %v404
        %v406 = vrot.slane %v294, %v405
        %v407 = vmul.f32 %v278, %v406
        %v408 = vmul.f32 %v279, %v406
        %v409 = vmul.f32 %v280, %v406
        %v410 = vmul.f32 %v281, %v406
        %v411 = vmul.f32 %v282, %v406
        %v412 = vmul.f32 %v283, %v406
        %v413 = vmul.f32 %v284, %v406
        %v414 = vmul.f32 %v285, %v406
        %v415 = vmul.f32 %v286, %v406
        %v416 = vmul.f32 %v287, %v406
        %v417 = vmul.f32 %v288, %v406
        %v418 = vmul.f32 %v289, %v406
        %v419 = vmul.f32 %v290, %v406
        %v420 = vmul.f32 %v291, %v406
        %v421 = vmul.f32 %v292, %v406
        %v422 = vmul.f32 %v293, %v406
        %423 = vst [vmem:[#allocation2 + $0x180] sm:$0xff] %v407
        %424 = vst [vmem:[#allocation2 + $0x188] sm:$0xff] %v408
        %425 = vst [vmem:[#allocation2 + $0x190] sm:$0xff] %v409
        %426 = vst [vmem:[#allocation2 + $0x198] sm:$0xff] %v410
        %427 = vst [vmem:[#allocation2 + $0x1a0] sm:$0xff] %v411
        %428 = vst [vmem:[#allocation2 + $0x1a8] sm:$0xff] %v412
        %429 = vst [vmem:[#allocation2 + $0x1b0] sm:$0xff] %v413
        %430 = vst [vmem:[#allocation2 + $0x1b8] sm:$0xff] %v414
        %431 = vst [vmem:[#allocation2 + $0x1c0] sm:$0xff] %v415
        %432 = vst [vmem:[#allocation2 + $0x1c8] sm:$0xff] %v416
        %433 = vst [vmem:[#allocation2 + $0x1d0] sm:$0xff] %v417
        %434 = vst [vmem:[#allocation2 + $0x1d8] sm:$0xff] %v418
        %435 = vst [vmem:[#allocation2 + $0x1e0] sm:$0xff] %v419
        %436 = vst [vmem:[#allocation2 + $0x1e8] sm:$0xff] %v420
        %437 = vst [vmem:[#allocation2 + $0x1f0] sm:$0xff] %v421
        %438 = vst [vmem:[#allocation2 + $0x1f8] sm:$0xff] %v422
        %v439 = vld [vmem:[%s235] sm:$0xff]
        %v440 = vld [vmem:[%s235 + $0x8] sm:$0xff]
        %v441 = vld [vmem:[%s235 + $0x10] sm:$0xff]
        %v442 = vld [vmem:[%s235 + $0x18] sm:$0xff]
        %v443 = vld [vmem:[%s235 + $0x20] sm:$0xff]
        %v444 = vld [vmem:[%s235 + $0x28] sm:$0xff]
        %v445 = vld [vmem:[%s235 + $0x30] sm:$0xff]
        %v446 = vld [vmem:[%s235 + $0x38] sm:$0xff]
        %v447 = vld [vmem:[%s235 + $0x40] sm:$0xff]
        %v448 = vld [vmem:[%s235 + $0x48] sm:$0xff]
        %v449 = vld [vmem:[%s235 + $0x50] sm:$0xff]
        %v450 = vld [vmem:[%s235 + $0x58] sm:$0xff]
        %v451 = vld [vmem:[%s235 + $0x60] sm:$0xff]
        %v452 = vld [vmem:[%s235 + $0x68] sm:$0xff]
        %v453 = vld [vmem:[%s235 + $0x70] sm:$0xff]
        %v454 = vld [vmem:[%s235 + $0x78] sm:$0xff]
        %v455 = vld [vmem:[#allocation2] sm:$0xff]
        %v456 = vld [vmem:[#allocation2 + $0x8] sm:$0xff]
        %v457 = vld [vmem:[#allocation2 + $0x10] sm:$0xff]
        %v458 = vld [vmem:[#allocation2 + $0x18] sm:$0xff]
        %v459 = vld [vmem:[#allocation2 + $0x20] sm:$0xff]
        %v460 = vld [vmem:[#allocation2 + $0x28] sm:$0xff]
        %v461 = vld [vmem:[#allocation2 + $0x30] sm:$0xff]
        %v462 = vld [vmem:[#allocation2 + $0x38] sm:$0xff]
        %v463 = vld [vmem:[#allocation2 + $0x40] sm:$0xff]
        %v464 = vld [vmem:[#allocation2 + $0x48] sm:$0xff]
        %v465 = vld [vmem:[#allocation2 + $0x50] sm:$0xff]
        %v466 = vld [vmem:[#allocation2 + $0x58] sm:$0xff]
        %v467 = vld [vmem:[#allocation2 + $0x60] sm:$0xff]
        %v468 = vld [vmem:[#allocation2 + $0x68] sm:$0xff]
        %v469 = vld [vmem:[#allocation2 + $0x70] sm:$0xff]
        %v470 = vld [vmem:[#allocation2 + $0x78] sm:$0xff]
        %v471 = vld [vmem:[#allocation2 + $0x80] sm:$0xff]
        %v472 = vld [vmem:[#allocation2 + $0x88] sm:$0xff]
        %v473 = vld [vmem:[#allocation2 + $0x90] sm:$0xff]
        %v474 = vld [vmem:[#allocation2 + $0x98] sm:$0xff]
        %v475 = vld [vmem:[#allocation2 + $0xa0] sm:$0xff]
        %v476 = vld [vmem:[#allocation2 + $0xa8] sm:$0xff]
        %v477 = vld [vmem:[#allocation2 + $0xb0] sm:$0xff]
        %v478 = vld [vmem:[#allocation2 + $0xb8] sm:$0xff]
        %v479 = vld [vmem:[#allocation2 + $0xc0] sm:$0xff]
        %v480 = vld [vmem:[#allocation2 + $0xc8] sm:$0xff]
        %v481 = vld [vmem:[#allocation2 + $0xd0] sm:$0xff]
        %v482 = vld [vmem:[#allocation2 + $0xd8] sm:$0xff]
        %v483 = vld [vmem:[#allocation2 + $0xe0] sm:$0xff]
        %v484 = vld [vmem:[#allocation2 + $0xe8] sm:$0xff]
        %v485 = vld [vmem:[#allocation2 + $0xf0] sm:$0xff]
        %v486 = vld [vmem:[#allocation2 + $0xf8] sm:$0xff]
        %v487 = vld [vmem:[#allocation2 + $0x100] sm:$0xff]
        %v488 = vld [vmem:[#allocation2 + $0x108] sm:$0xff]
        %v489 = vld [vmem:[#allocation2 + $0x110] sm:$0xff]
        %v490 = vld [vmem:[#allocation2 + $0x118] sm:$0xff]
        %v491 = vld [vmem:[#allocation2 + $0x120] sm:$0xff]
        %v492 = vld [vmem:[#allocation2 + $0x128] sm:$0xff]
        %v493 = vld [vmem:[#allocation2 + $0x130] sm:$0xff]
        %v494 = vld [vmem:[#allocation2 + $0x138] sm:$0xff]
        %v495 = vld [vmem:[#allocation2 + $0x140] sm:$0xff]
        %v496 = vld [vmem:[#allocation2 + $0x148] sm:$0xff]
        %v497 = vld [vmem:[#allocation2 + $0x150] sm:$0xff]
        %v498 = vld [vmem:[#allocation2 + $0x158] sm:$0xff]
        %v499 = vld [vmem:[#allocation2 + $0x160] sm:$0xff]
        %v500 = vld [vmem:[#allocation2 + $0x168] sm:$0xff]
        %v501 = vld [vmem:[#allocation2 + $0x170] sm:$0xff]
        %v502 = vld [vmem:[#allocation2 + $0x178] sm:$0xff]
        %v503 = vld [vmem:[#allocation2 + $0x180] sm:$0xff]
        %v504 = vld [vmem:[#allocation2 + $0x188] sm:$0xff]
        %v505 = vld [vmem:[#allocation2 + $0x190] sm:$0xff]
        %v506 = vld [vmem:[#allocation2 + $0x198] sm:$0xff]
        %v507 = vld [vmem:[#allocation2 + $0x1a0] sm:$0xff]
        %v508 = vld [vmem:[#allocation2 + $0x1a8] sm:$0xff]
        %v509 = vld [vmem:[#allocation2 + $0x1b0] sm:$0xff]
        %v510 = vld [vmem:[#allocation2 + $0x1b8] sm:$0xff]
        %v511 = vld [vmem:[#allocation2 + $0x1c0] sm:$0xff]
        %v512 = vld [vmem:[#allocation2 + $0x1c8] sm:$0xff]
        %v513 = vld [vmem:[#allocation2 + $0x1d0] sm:$0xff]
        %v514 = vld [vmem:[#allocation2 + $0x1d8] sm:$0xff]
        %v515 = vld [vmem:[#allocation2 + $0x1e0] sm:$0xff]
        %v516 = vld [vmem:[#allocation2 + $0x1e8] sm:$0xff]
        %v517 = vld [vmem:[#allocation2 + $0x1f0] sm:$0xff]
        %v518 = vld [vmem:[#allocation2 + $0x1f8] sm:$0xff]
        %519 = vmatprep.subr.mxu0 0.0
        %520 = vmatpush1.xpose.msra.mxu0 %v439
        %521 = vmatprep.subr.mxu0 0.0
        %522 = vmatpush1.xpose.msra.mxu0 %v440
        %523 = vmatprep.subr.mxu0 0.0
        %524 = vmatpush1.xpose.msra.mxu0 %v441
        %525 = vmatprep.subr.mxu0 0.0
        %526 = vmatpush1.xpose.msra.mxu0 %v442
        %527 = vmatprep.subr.mxu0 0.0
        %528 = vmatpush1.xpose.msra.mxu0 %v443
        %529 = vmatprep.subr.mxu0 0.0
        %530 = vmatpush1.xpose.msra.mxu0 %v444
        %531 = vmatprep.subr.mxu0 0.0
        %532 = vmatpush1.xpose.msra.mxu0 %v445
        %533 = vmatprep.subr.mxu0 0.0
        %534 = vmatpush1.xpose.msra.mxu0 %v446
        %535 = vmatprep.subr.mxu0 0.0
        %536 = vmatpush1.xpose.msra.mxu0 %v447
        %537 = vmatprep.subr.mxu0 0.0
        %538 = vmatpush1.xpose.msra.mxu0 %v448
        %539 = vmatprep.subr.mxu0 0.0
        %540 = vmatpush1.xpose.msra.mxu0 %v449
        %541 = vmatprep.subr.mxu0 0.0
        %542 = vmatpush1.xpose.msra.mxu0 %v450
        %543 = vmatprep.subr.mxu0 0.0
        %544 = vmatpush1.xpose.msra.mxu0 %v451
        %545 = vmatprep.subr.mxu0 0.0
        %546 = vmatpush1.xpose.msra.mxu0 %v452
        %547 = vmatprep.subr.mxu0 0.0
        %548 = vmatpush1.xpose.msra.mxu0 %v453
        %549 = vmatprep.subr.mxu0 0.0
        %550 = vmatpush1.xpose.msra.mxu0 %v454
        %551 = vmatprep.subr.mxu0 0.0
        %552 = vmatpush1.xpose.msra.mxu0 0.0
        %553 = vmatprep.subr.mxu0 0.0
        %554 = vmatpush1.xpose.msra.mxu0 0.0
        %555 = vmatprep.subr.mxu0 0.0
        %556 = vmatpush1.xpose.msra.mxu0 0.0
        %557 = vmatprep.subr.mxu0 0.0
        %558 = vmatpush1.xpose.msra.mxu0 0.0
        %559 = vmatprep.subr.mxu0 0.0
        %560 = vmatpush1.xpose.msra.mxu0 0.0
        %561 = vmatprep.subr.mxu0 0.0
        %562 = vmatpush1.xpose.msra.mxu0 0.0
        %563 = vmatprep.subr.mxu0 0.0
        %564 = vmatpush1.xpose.msra.mxu0 0.0
        %565 = vmatprep.subr.mxu0 0.0
        %566 = vmatpush1.xpose.msra.mxu0 0.0
        %567 = vmatprep.subr.mxu0 0.0
        %568 = vmatpush1.xpose.msra.mxu0 0.0
        %569 = vmatprep.subr.mxu0 0.0
        %570 = vmatpush1.xpose.msra.mxu0 0.0
        %571 = vmatprep.subr.mxu0 0.0
        %572 = vmatpush1.xpose.msra.mxu0 0.0
        %573 = vmatprep.subr.mxu0 0.0
        %574 = vmatpush1.xpose.msra.mxu0 0.0
        %575 = vmatprep.subr.mxu0 0.0
        %576 = vmatpush1.xpose.msra.mxu0 0.0
        %577 = vmatprep.subr.mxu0 0.0
        %578 = vmatpush1.xpose.msra.mxu0 0.0
        %579 = vmatprep.subr.mxu0 0.0
        %580 = vmatpush1.xpose.msra.mxu0 0.0
        %581 = vmatprep.subr.mxu0 0.0
        %582 = vmatpush1.xpose.msra.mxu0 0.0
        %583 = vmatprep.mubr.f32.mxu0 0.0
        %584 = vmatmul.mubr.f32.gmra.mrb[0].mxu0 %v455
        %v585 = vpop.f32.mrb[0].mxu0
        %v586 = vadd.f32 0.0, %v585
        %v587 = vpop.f32.mrb[0].mxu0
        %588 = vmatprep.mubr.f32.mxu0 0.0
        %589 = vmatmul.mubr.f32.gmra.mrb[0].mxu0 %v456
        %v590 = vpop.f32.mrb[0].mxu0
        %v591 = vadd.f32 0.0, %v590
        %v592 = vpop.f32.mrb[0].mxu0
        %593 = vmatprep.mubr.f32.mxu0 0.0
        %594 = vmatmul.mubr.f32.gmra.mrb[0].mxu0 %v457
        %v595 = vpop.f32.mrb[0].mxu0
        %v596 = vadd.f32 0.0, %v595
        %v597 = vpop.f32.mrb[0].mxu0
        %598 = vmatprep.mubr.f32.mxu0 0.0
        %599 = vmatmul.mubr.f32.gmra.mrb[0].mxu0 %v458
        %v600 = vpop.f32.mrb[0].mxu0
        %v601 = vadd.f32 0.0, %v600
        %v602 = vpop.f32.mrb[0].mxu0
        %603 = vmatprep.mubr.f32.mxu0 0.0
        %604 = vmatmul.mubr.f32.gmra.mrb[0].mxu0 %v459
        %v605 = vpop.f32.mrb[0].mxu0
        %v606 = vadd.f32 0.0, %v605
        %v607 = vpop.f32.mrb[0].mxu0
        %608 = vmatprep.mubr.f32.mxu0 0.0
        %609 = vmatmul.mubr.f32.gmra.mrb[0].mxu0 %v460
        %v610 = vpop.f32.mrb[0].mxu0
        %v611 = vadd.f32 0.0, %v610
        %v612 = vpop.f32.mrb[0].mxu0
        %613 = vmatprep.mubr.f32.mxu0 0.0
        %614 = vmatmul.mubr.f32.gmra.mrb[0].mxu0 %v461
        %v615 = vpop.f32.mrb[0].mxu0
        %v616 = vadd.f32 0.0, %v615
        %v617 = vpop.f32.mrb[0].mxu0
        %618 = vmatprep.mubr.f32.mxu0 0.0
        %619 = vmatmul.mubr.f32.gmra.mrb[0].mxu0 %v462
        %v620 = vpop.f32.mrb[0].mxu0
        %v621 = vadd.f32 0.0, %v620
        %v622 = vpop.f32.mrb[0].mxu0
        %623 = vmatprep.mubr.f32.mxu0 0.0
        %624 = vmatmul.mubr.f32.gmra.mrb[0].mxu0 %v463
        %v625 = vpop.f32.mrb[0].mxu0
        %v626 = vadd.f32 0.0, %v625
        %v627 = vpop.f32.mrb[0].mxu0
        %628 = vmatprep.mubr.f32.mxu0 0.0
        %629 = vmatmul.mubr.f32.gmra.mrb[0].mxu0 %v464
        %v630 = vpop.f32.mrb[0].mxu0
        %v631 = vadd.f32 0.0, %v630
        %v632 = vpop.f32.mrb[0].mxu0
        %633 = vmatprep.mubr.f32.mxu0 0.0
        %634 = vmatmul.mubr.f32.gmra.mrb[0].mxu0 %v465
        %v635 = vpop.f32.mrb[0].mxu0
        %v636 = vadd.f32 0.0, %v635
        %v637 = vpop.f32.mrb[0].mxu0
        %638 = vmatprep.mubr.f32.mxu0 0.0
        %639 = vmatmul.mubr.f32.gmra.mrb[0].mxu0 %v466
        %v640 = vpop.f32.mrb[0].mxu0
        %v641 = vadd.f32 0.0, %v640
        %v642 = vpop.f32.mrb[0].mxu0
        %643 = vmatprep.mubr.f32.mxu0 0.0
        %644 = vmatmul.mubr.f32.gmra.mrb[0].mxu0 %v467
        %v645 = vpop.f32.mrb[0].mxu0
        %v646 = vadd.f32 0.0, %v645
        %v647 = vpop.f32.mrb[0].mxu0
        %648 = vmatprep.mubr.f32.mxu0 0.0
        %649 = vmatmul.mubr.f32.gmra.mrb[0].mxu0 %v468
        %v650 = vpop.f32.mrb[0].mxu0
        %v651 = vadd.f32 0.0, %v650
        %v652 = vpop.f32.mrb[0].mxu0
        %653 = vmatprep.mubr.f32.mxu0 0.0
        %654 = vmatmul.mubr.f32.gmra.mrb[0].mxu0 %v469
        %v655 = vpop.f32.mrb[0].mxu0
        %v656 = vadd.f32 0.0, %v655
        %v657 = vpop.f32.mrb[0].mxu0
        %658 = vmatprep.mubr.f32.mxu0 0.0
        %659 = vmatmul.mubr.f32.gmra.mrb[0].mxu0 %v470
        %v660 = vpop.f32.mrb[0].mxu0
        %v661 = vadd.f32 0.0, %v660
        %v662 = vpop.f32.mrb[0].mxu0
        %663 = vmatprep.mubr.f32.mxu0 0.0
        %664 = vmatmul.mubr.f32.gmra.mrb[0].mxu0 %v471
        %v665 = vpop.f32.mrb[0].mxu0
        %v666 = vadd.f32 0.0, %v665
        %v667 = vpop.f32.mrb[0].mxu0
        %668 = vmatprep.mubr.f32.mxu0 0.0
        %669 = vmatmul.mubr.f32.gmra.mrb[0].mxu0 %v472
        %v670 = vpop.f32.mrb[0].mxu0
        %v671 = vadd.f32 0.0, %v670
        %v672 = vpop.f32.mrb[0].mxu0
        %673 = vmatprep.mubr.f32.mxu0 0.0
        %674 = vmatmul.mubr.f32.gmra.mrb[0].mxu0 %v473
        %v675 = vpop.f32.mrb[0].mxu0
        %v676 = vadd.f32 0.0, %v675
        %v677 = vpop.f32.mrb[0].mxu0
        %678 = vmatprep.mubr.f32.mxu0 0.0
        %679 = vmatmul.mubr.f32.gmra.mrb[0].mxu0 %v474
        %v680 = vpop.f32.mrb[0].mxu0
        %v681 = vadd.f32 0.0, %v680
        %v682 = vpop.f32.mrb[0].mxu0
        %683 = vmatprep.mubr.f32.mxu0 0.0
        %684 = vmatmul.mubr.f32.gmra.mrb[0].mxu0 %v475
        %v685 = vpop.f32.mrb[0].mxu0
        %v686 = vadd.f32 0.0, %v685
        %v687 = vpop.f32.mrb[0].mxu0
        %688 = vmatprep.mubr.f32.mxu0 0.0
        %689 = vmatmul.mubr.f32.gmra.mrb[0].mxu0 %v476
        %v690 = vpop.f32.mrb[0].mxu0
        %v691 = vadd.f32 0.0, %v690
        %v692 = vpop.f32.mrb[0].mxu0
        %693 = vmatprep.mubr.f32.mxu0 0.0
        %694 = vmatmul.mubr.f32.gmra.mrb[0].mxu0 %v477
        %v695 = vpop.f32.mrb[0].mxu0
        %v696 = vadd.f32 0.0, %v695
        %v697 = vpop.f32.mrb[0].mxu0
        %698 = vmatprep.mubr.f32.mxu0 0.0
        %699 = vmatmul.mubr.f32.gmra.mrb[0].mxu0 %v478
        %v700 = vpop.f32.mrb[0].mxu0
        %v701 = vadd.f32 0.0, %v700
        %v702 = vpop.f32.mrb[0].mxu0
        %703 = vmatprep.mubr.f32.mxu0 0.0
        %704 = vmatmul.mubr.f32.gmra.mrb[0].mxu0 %v479
        %v705 = vpop.f32.mrb[0].mxu0
        %v706 = vadd.f32 0.0, %v705
        %v707 = vpop.f32.mrb[0].mxu0
        %708 = vmatprep.mubr.f32.mxu0 0.0
        %709 = vmatmul.mubr.f32.gmra.mrb[0].mxu0 %v480
        %v710 = vpop.f32.mrb[0].mxu0
        %v711 = vadd.f32 0.0, %v710
        %v712 = vpop.f32.mrb[0].mxu0
        %713 = vmatprep.mubr.f32.mxu0 0.0
        %714 = vmatmul.mubr.f32.gmra.mrb[0].mxu0 %v481
        %v715 = vpop.f32.mrb[0].mxu0
        %v716 = vadd.f32 0.0, %v715
        %v717 = vpop.f32.mrb[0].mxu0
        %718 = vmatprep.mubr.f32.mxu0 0.0
        %719 = vmatmul.mubr.f32.gmra.mrb[0].mxu0 %v482
        %v720 = vpop.f32.mrb[0].mxu0
        %v721 = vadd.f32 0.0, %v720
        %v722 = vpop.f32.mrb[0].mxu0
        %723 = vmatprep.mubr.f32.mxu0 0.0
        %724 = vmatmul.mubr.f32.gmra.mrb[0].mxu0 %v483
        %v725 = vpop.f32.mrb[0].mxu0
        %v726 = vadd.f32 0.0, %v725
        %v727 = vpop.f32.mrb[0].mxu0
        %728 = vmatprep.mubr.f32.mxu0 0.0
        %729 = vmatmul.mubr.f32.gmra.mrb[0].mxu0 %v484
        %v730 = vpop.f32.mrb[0].mxu0
        %v731 = vadd.f32 0.0, %v730
        %v732 = vpop.f32.mrb[0].mxu0
        %733 = vmatprep.mubr.f32.mxu0 0.0
        %734 = vmatmul.mubr.f32.gmra.mrb[0].mxu0 %v485
        %v735 = vpop.f32.mrb[0].mxu0
        %v736 = vadd.f32 0.0, %v735
        %v737 = vpop.f32.mrb[0].mxu0
        %738 = vmatprep.mubr.f32.mxu0 0.0
        %739 = vmatmul.mubr.f32.gmra.mrb[0].mxu0 %v486
        %v740 = vpop.f32.mrb[0].mxu0
        %v741 = vadd.f32 0.0, %v740
        %v742 = vpop.f32.mrb[0].mxu0
        %743 = vmatprep.mubr.f32.mxu0 0.0
        %744 = vmatmul.mubr.f32.gmra.mrb[0].mxu0 %v487
        %v745 = vpop.f32.mrb[0].mxu0
        %v746 = vadd.f32 0.0, %v745
        %v747 = vpop.f32.mrb[0].mxu0
        %748 = vmatprep.mubr.f32.mxu0 0.0
        %749 = vmatmul.mubr.f32.gmra.mrb[0].mxu0 %v488
        %v750 = vpop.f32.mrb[0].mxu0
        %v751 = vadd.f32 0.0, %v750
        %v752 = vpop.f32.mrb[0].mxu0
        %753 = vmatprep.mubr.f32.mxu0 0.0
        %754 = vmatmul.mubr.f32.gmra.mrb[0].mxu0 %v489
        %v755 = vpop.f32.mrb[0].mxu0
        %v756 = vadd.f32 0.0, %v755
        %v757 = vpop.f32.mrb[0].mxu0
        %758 = vmatprep.mubr.f32.mxu0 0.0
        %759 = vmatmul.mubr.f32.gmra.mrb[0].mxu0 %v490
        %v760 = vpop.f32.mrb[0].mxu0
        %v761 = vadd.f32 0.0, %v760
        %v762 = vpop.f32.mrb[0].mxu0
        %763 = vmatprep.mubr.f32.mxu0 0.0
        %764 = vmatmul.mubr.f32.gmra.mrb[0].mxu0 %v491
        %v765 = vpop.f32.mrb[0].mxu0
        %v766 = vadd.f32 0.0, %v765
        %v767 = vpop.f32.mrb[0].mxu0
        %768 = vmatprep.mubr.f32.mxu0 0.0
        %769 = vmatmul.mubr.f32.gmra.mrb[0].mxu0 %v492
        %v770 = vpop.f32.mrb[0].mxu0
        %v771 = vadd.f32 0.0, %v770
        %v772 = vpop.f32.mrb[0].mxu0
        %773 = vmatprep.mubr.f32.mxu0 0.0
        %774 = vmatmul.mubr.f32.gmra.mrb[0].mxu0 %v493
        %v775 = vpop.f32.mrb[0].mxu0
        %v776 = vadd.f32 0.0, %v775
        %v777 = vpop.f32.mrb[0].mxu0
        %778 = vmatprep.mubr.f32.mxu0 0.0
        %779 = vmatmul.mubr.f32.gmra.mrb[0].mxu0 %v494
        %v780 = vpop.f32.mrb[0].mxu0
        %v781 = vadd.f32 0.0, %v780
        %v782 = vpop.f32.mrb[0].mxu0
        %783 = vmatprep.mubr.f32.mxu0 0.0
        %784 = vmatmul.mubr.f32.gmra.mrb[0].mxu0 %v495
        %v785 = vpop.f32.mrb[0].mxu0
        %v786 = vadd.f32 0.0, %v785
        %v787 = vpop.f32.mrb[0].mxu0
        %788 = vmatprep.mubr.f32.mxu0 0.0
        %789 = vmatmul.mubr.f32.gmra.mrb[0].mxu0 %v496
        %v790 = vpop.f32.mrb[0].mxu0
        %v791 = vadd.f32 0.0, %v790
        %v792 = vpop.f32.mrb[0].mxu0
        %793 = vmatprep.mubr.f32.mxu0 0.0
        %794 = vmatmul.mubr.f32.gmra.mrb[0].mxu0 %v497
        %v795 = vpop.f32.mrb[0].mxu0
        %v796 = vadd.f32 0.0, %v795
        %v797 = vpop.f32.mrb[0].mxu0
        %798 = vmatprep.mubr.f32.mxu0 0.0
        %799 = vmatmul.mubr.f32.gmra.mrb[0].mxu0 %v498
        %v800 = vpop.f32.mrb[0].mxu0
        %v801 = vadd.f32 0.0, %v800
        %v802 = vpop.f32.mrb[0].mxu0
        %803 = vmatprep.mubr.f32.mxu0 0.0
        %804 = vmatmul.mubr.f32.gmra.mrb[0].mxu0 %v499
        %v805 = vpop.f32.mrb[0].mxu0
        %v806 = vadd.f32 0.0, %v805
        %v807 = vpop.f32.mrb[0].mxu0
        %808 = vmatprep.mubr.f32.mxu0 0.0
        %809 = vmatmul.mubr.f32.gmra.mrb[0].mxu0 %v500
        %v810 = vpop.f32.mrb[0].mxu0
        %v811 = vadd.f32 0.0, %v810
        %v812 = vpop.f32.mrb[0].mxu0
        %813 = vmatprep.mubr.f32.mxu0 0.0
        %814 = vmatmul.mubr.f32.gmra.mrb[0].mxu0 %v501
        %v815 = vpop.f32.mrb[0].mxu0
        %v816 = vadd.f32 0.0, %v815
        %v817 = vpop.f32.mrb[0].mxu0
        %818 = vmatprep.mubr.f32.mxu0 0.0
        %819 = vmatmul.mubr.f32.gmra.mrb[0].mxu0 %v502
        %v820 = vpop.f32.mrb[0].mxu0
        %v821 = vadd.f32 0.0, %v820
        %v822 = vpop.f32.mrb[0].mxu0
        %823 = vmatprep.mubr.f32.mxu0 0.0
        %824 = vmatmul.mubr.f32.gmra.mrb[0].mxu0 %v503
        %v825 = vpop.f32.mrb[0].mxu0
        %v826 = vadd.f32 0.0, %v825
        %v827 = vpop.f32.mrb[0].mxu0
        %828 = vmatprep.mubr.f32.mxu0 0.0
        %829 = vmatmul.mubr.f32.gmra.mrb[0].mxu0 %v504
        %v830 = vpop.f32.mrb[0].mxu0
        %v831 = vadd.f32 0.0, %v830
        %v832 = vpop.f32.mrb[0].mxu0
        %833 = vmatprep.mubr.f32.mxu0 0.0
        %834 = vmatmul.mubr.f32.gmra.mrb[0].mxu0 %v505
        %v835 = vpop.f32.mrb[0].mxu0
        %v836 = vadd.f32 0.0, %v835
        %v837 = vpop.f32.mrb[0].mxu0
        %838 = vmatprep.mubr.f32.mxu0 0.0
        %839 = vmatmul.mubr.f32.gmra.mrb[0].mxu0 %v506
        %v840 = vpop.f32.mrb[0].mxu0
        %v841 = vadd.f32 0.0, %v840
        %v842 = vpop.f32.mrb[0].mxu0
        %843 = vmatprep.mubr.f32.mxu0 0.0
        %844 = vmatmul.mubr.f32.gmra.mrb[0].mxu0 %v507
        %v845 = vpop.f32.mrb[0].mxu0
        %v846 = vadd.f32 0.0, %v845
        %v847 = vpop.f32.mrb[0].mxu0
        %848 = vmatprep.mubr.f32.mxu0 0.0
        %849 = vmatmul.mubr.f32.gmra.mrb[0].mxu0 %v508
        %v850 = vpop.f32.mrb[0].mxu0
        %v851 = vadd.f32 0.0, %v850
        %v852 = vpop.f32.mrb[0].mxu0
        %853 = vmatprep.mubr.f32.mxu0 0.0
        %854 = vmatmul.mubr.f32.gmra.mrb[0].mxu0 %v509
        %v855 = vpop.f32.mrb[0].mxu0
        %v856 = vadd.f32 0.0, %v855
        %v857 = vpop.f32.mrb[0].mxu0
        %858 = vmatprep.mubr.f32.mxu0 0.0
        %859 = vmatmul.mubr.f32.gmra.mrb[0].mxu0 %v510
        %v860 = vpop.f32.mrb[0].mxu0
        %v861 = vadd.f32 0.0, %v860
        %v862 = vpop.f32.mrb[0].mxu0
        %863 = vmatprep.mubr.f32.mxu0 0.0
        %864 = vmatmul.mubr.f32.gmra.mrb[0].mxu0 %v511
        %v865 = vpop.f32.mrb[0].mxu0
        %v866 = vadd.f32 0.0, %v865
        %v867 = vpop.f32.mrb[0].mxu0
        %868 = vmatprep.mubr.f32.mxu0 0.0
        %869 = vmatmul.mubr.f32.gmra.mrb[0].mxu0 %v512
        %v870 = vpop.f32.mrb[0].mxu0
        %v871 = vadd.f32 0.0, %v870
        %v872 = vpop.f32.mrb[0].mxu0
        %873 = vmatprep.mubr.f32.mxu0 0.0
        %874 = vmatmul.mubr.f32.gmra.mrb[0].mxu0 %v513
        %v875 = vpop.f32.mrb[0].mxu0
        %v876 = vadd.f32 0.0, %v875
        %v877 = vpop.f32.mrb[0].mxu0
        %878 = vmatprep.mubr.f32.mxu0 0.0
        %879 = vmatmul.mubr.f32.gmra.mrb[0].mxu0 %v514
        %v880 = vpop.f32.mrb[0].mxu0
        %v881 = vadd.f32 0.0, %v880
        %v882 = vpop.f32.mrb[0].mxu0
        %883 = vmatprep.mubr.f32.mxu0 0.0
        %884 = vmatmul.mubr.f32.gmra.mrb[0].mxu0 %v515
        %v885 = vpop.f32.mrb[0].mxu0
        %v886 = vadd.f32 0.0, %v885
        %v887 = vpop.f32.mrb[0].mxu0
        %888 = vmatprep.mubr.f32.mxu0 0.0
        %889 = vmatmul.mubr.f32.gmra.mrb[0].mxu0 %v516
        %v890 = vpop.f32.mrb[0].mxu0
        %v891 = vadd.f32 0.0, %v890
        %v892 = vpop.f32.mrb[0].mxu0
        %893 = vmatprep.mubr.f32.mxu0 0.0
        %894 = vmatmul.mubr.f32.gmra.mrb[0].mxu0 %v517
        %v895 = vpop.f32.mrb[0].mxu0
        %v896 = vadd.f32 0.0, %v895
        %v897 = vpop.f32.mrb[0].mxu0
        %898 = vmatprep.mubr.f32.mxu0 0.0
        %899 = vmatmul.mubr.f32.gmra.mrb[0].mxu0 %v518
        %v900 = vpop.f32.mrb[0].mxu0
        %v901 = vadd.f32 0.0, %v900
        %v902 = vpop.f32.mrb[0].mxu0
        %903 = vdwg.mxu0
        %v904 = vld [vmem:[%s244] sm:$0xff]
        %v905 = vld [vmem:[%s244 + $0x8] sm:$0xff]
        %v906 = vld [vmem:[%s244 + $0x10] sm:$0xff]
        %v907 = vld [vmem:[%s244 + $0x18] sm:$0xff]
        %v908 = vunpack.c.0.s8 %v904
        %v909 = vunpack.c.1.s8 %v904
        %v910 = vunpack.c.2.s8 %v904
        %v911 = vunpack.c.3.s8 %v904
        %v912 = vunpack.c.0.s8 %v905
        %v913 = vunpack.c.1.s8 %v905
        %v914 = vunpack.c.2.s8 %v905
        %v915 = vunpack.c.3.s8 %v905
        %v916 = vunpack.c.0.s8 %v906
        %v917 = vunpack.c.1.s8 %v906
        %v918 = vunpack.c.2.s8 %v906
        %v919 = vunpack.c.3.s8 %v906
        %v920 = vunpack.c.0.s8 %v907
        %v921 = vunpack.c.1.s8 %v907
        %v922 = vunpack.c.2.s8 %v907
        %v923 = vunpack.c.3.s8 %v907
        %v924 = vld [vmem:[%s3] sm:$0x1]
        %v926 = vlaneseq
        %v927 = vshrl.u32 %v926, 7
        %v928 = vsub.s32 0, %v927
        %v929 = vrot.slane %v924, %v928
        %vm931 = vcmp.eq.s32.totalorder %v908, 1
        %vm932 = vcmp.eq.s32.totalorder %v909, 1
        %vm933 = vcmp.eq.s32.totalorder %v910, 1
        %vm934 = vcmp.eq.s32.totalorder %v911, 1
        %vm935 = vcmp.eq.s32.totalorder %v912, 1
        %vm936 = vcmp.eq.s32.totalorder %v913, 1
        %vm937 = vcmp.eq.s32.totalorder %v914, 1
        %vm938 = vcmp.eq.s32.totalorder %v915, 1
        %vm939 = vcmp.eq.s32.totalorder %v916, 1
        %vm940 = vcmp.eq.s32.totalorder %v917, 1
        %vm941 = vcmp.eq.s32.totalorder %v918, 1
        %vm942 = vcmp.eq.s32.totalorder %v919, 1
        %vm943 = vcmp.eq.s32.totalorder %v920, 1
        %vm944 = vcmp.eq.s32.totalorder %v921, 1
        %vm945 = vcmp.eq.s32.totalorder %v922, 1
        %vm946 = vcmp.eq.s32.totalorder %v923, 1
        %v947 = vsel %vm931, %v586, %v929
        %v948 = vsel %vm932, %v591, %v929
        %v949 = vsel %vm933, %v596, %v929
        %v950 = vsel %vm934, %v601, %v929
        %v951 = vsel %vm935, %v606, %v929
        %v952 = vsel %vm936, %v611, %v929
        %v953 = vsel %vm937, %v616, %v929
        %v954 = vsel %vm938, %v621, %v929
        %v955 = vsel %vm939, %v626, %v929
        %v956 = vsel %vm940, %v631, %v929
        %v957 = vsel %vm941, %v636, %v929
        %v958 = vsel %vm942, %v641, %v929
        %v959 = vsel %vm943, %v646, %v929
        %v960 = vsel %vm944, %v651, %v929
        %v961 = vsel %vm945, %v656, %v929
        %v962 = vsel %vm946, %v661, %v929
        %vm963 = vcmp.eq.s32.totalorder %v908, 2
        %vm964 = vcmp.eq.s32.totalorder %v909, 2
        %vm965 = vcmp.eq.s32.totalorder %v910, 2
        %vm966 = vcmp.eq.s32.totalorder %v911, 2
        %vm967 = vcmp.eq.s32.totalorder %v912, 2
        %vm968 = vcmp.eq.s32.totalorder %v913, 2
        %vm969 = vcmp.eq.s32.totalorder %v914, 2
        %vm970 = vcmp.eq.s32.totalorder %v915, 2
        %vm971 = vcmp.eq.s32.totalorder %v916, 2
        %vm972 = vcmp.eq.s32.totalorder %v917, 2
        %vm973 = vcmp.eq.s32.totalorder %v918, 2
        %vm974 = vcmp.eq.s32.totalorder %v919, 2
        %vm975 = vcmp.eq.s32.totalorder %v920, 2
        %vm976 = vcmp.eq.s32.totalorder %v921, 2
        %vm977 = vcmp.eq.s32.totalorder %v922, 2
        %vm978 = vcmp.eq.s32.totalorder %v923, 2
        %v979 = vsel %vm963, %v666, %v947
        %v980 = vsel %vm964, %v671, %v948
        %v981 = vsel %vm965, %v676, %v949
        %v982 = vsel %vm966, %v681, %v950
        %v983 = vsel %vm967, %v686, %v951
        %v984 = vsel %vm968, %v691, %v952
        %v985 = vsel %vm969, %v696, %v953
        %v986 = vsel %vm970, %v701, %v954
        %v987 = vsel %vm971, %v706, %v955
        %v988 = vsel %vm972, %v711, %v956
        %v989 = vsel %vm973, %v716, %v957
        %v990 = vsel %vm974, %v721, %v958
        %v991 = vsel %vm975, %v726, %v959
        %v992 = vsel %vm976, %v731, %v960
        %v993 = vsel %vm977, %v736, %v961
        %v994 = vsel %vm978, %v741, %v962
        %vm995 = vcmp.eq.s32.totalorder %v908, 3
        %vm996 = vcmp.eq.s32.totalorder %v909, 3
        %vm997 = vcmp.eq.s32.totalorder %v910, 3
        %vm998 = vcmp.eq.s32.totalorder %v911, 3
        %vm999 = vcmp.eq.s32.totalorder %v912, 3
        %vm1000 = vcmp.eq.s32.totalorder %v913, 3
        %vm1001 = vcmp.eq.s32.totalorder %v914, 3
        %vm1002 = vcmp.eq.s32.totalorder %v915, 3
        %vm1003 = vcmp.eq.s32.totalorder %v916, 3
        %vm1004 = vcmp.eq.s32.totalorder %v917, 3
        %vm1005 = vcmp.eq.s32.totalorder %v918, 3
        %vm1006 = vcmp.eq.s32.totalorder %v919, 3
        %vm1007 = vcmp.eq.s32.totalorder %v920, 3
        %vm1008 = vcmp.eq.s32.totalorder %v921, 3
        %vm1009 = vcmp.eq.s32.totalorder %v922, 3
        %vm1010 = vcmp.eq.s32.totalorder %v923, 3
        %v1011 = vsel %vm995, %v746, %v979
        %v1012 = vsel %vm996, %v751, %v980
        %v1013 = vsel %vm997, %v756, %v981
        %v1014 = vsel %vm998, %v761, %v982
        %v1015 = vsel %vm999, %v766, %v983
        %v1016 = vsel %vm1000, %v771, %v984
        %v1017 = vsel %vm1001, %v776, %v985
        %v1018 = vsel %vm1002, %v781, %v986
        %v1019 = vsel %vm1003, %v786, %v987
        %v1020 = vsel %vm1004, %v791, %v988
        %v1021 = vsel %vm1005, %v796, %v989
        %v1022 = vsel %vm1006, %v801, %v990
        %v1023 = vsel %vm1007, %v806, %v991
        %v1024 = vsel %vm1008, %v811, %v992
        %v1025 = vsel %vm1009, %v816, %v993
        %v1026 = vsel %vm1010, %v821, %v994
        %vm1027 = vcmp.eq.s32.totalorder %v908, 4
        %vm1028 = vcmp.eq.s32.totalorder %v909, 4
        %vm1029 = vcmp.eq.s32.totalorder %v910, 4
        %vm1030 = vcmp.eq.s32.totalorder %v911, 4
        %vm1031 = vcmp.eq.s32.totalorder %v912, 4
        %vm1032 = vcmp.eq.s32.totalorder %v913, 4
        %vm1033 = vcmp.eq.s32.totalorder %v914, 4
        %vm1034 = vcmp.eq.s32.totalorder %v915, 4
        %vm1035 = vcmp.eq.s32.totalorder %v916, 4
        %vm1036 = vcmp.eq.s32.totalorder %v917, 4
        %vm1037 = vcmp.eq.s32.totalorder %v918, 4
        %vm1038 = vcmp.eq.s32.totalorder %v919, 4
        %vm1039 = vcmp.eq.s32.totalorder %v920, 4
        %vm1040 = vcmp.eq.s32.totalorder %v921, 4
        %vm1041 = vcmp.eq.s32.totalorder %v922, 4
        %vm1042 = vcmp.eq.s32.totalorder %v923, 4
        %v1043 = vsel %vm1027, %v826, %v1011
        %v1044 = vsel %vm1028, %v831, %v1012
        %v1045 = vsel %vm1029, %v836, %v1013
        %v1046 = vsel %vm1030, %v841, %v1014
        %v1047 = vsel %vm1031, %v846, %v1015
        %v1048 = vsel %vm1032, %v851, %v1016
        %v1049 = vsel %vm1033, %v856, %v1017
        %v1050 = vsel %vm1034, %v861, %v1018
        %v1051 = vsel %vm1035, %v866, %v1019
        %v1052 = vsel %vm1036, %v871, %v1020
        %v1053 = vsel %vm1037, %v876, %v1021
        %v1054 = vsel %vm1038, %v881, %v1022
        %v1055 = vsel %vm1039, %v886, %v1023
        %v1056 = vsel %vm1040, %v891, %v1024
        %v1057 = vsel %vm1041, %v896, %v1025
        %v1058 = vsel %vm1042, %v901, %v1026
        %vm1059 = vcmp.gt.f32.partialorder %v1043, 0.0
        %vm1060 = vcmp.gt.f32.partialorder %v1044, 0.0
        %vm1061 = vcmp.gt.f32.partialorder %v1045, 0.0
        %vm1062 = vcmp.gt.f32.partialorder %v1046, 0.0
        %vm1063 = vcmp.gt.f32.partialorder %v1047, 0.0
        %vm1064 = vcmp.gt.f32.partialorder %v1048, 0.0
        %vm1065 = vcmp.gt.f32.partialorder %v1049, 0.0
        %vm1066 = vcmp.gt.f32.partialorder %v1050, 0.0
        %vm1067 = vcmp.gt.f32.partialorder %v1051, 0.0
        %vm1068 = vcmp.gt.f32.partialorder %v1052, 0.0
        %vm1069 = vcmp.gt.f32.partialorder %v1053, 0.0
        %vm1070 = vcmp.gt.f32.partialorder %v1054, 0.0
        %vm1071 = vcmp.gt.f32.partialorder %v1055, 0.0
        %vm1072 = vcmp.gt.f32.partialorder %v1056, 0.0
        %vm1073 = vcmp.gt.f32.partialorder %v1057, 0.0
        %vm1074 = vcmp.gt.f32.partialorder %v1058, 0.0
        %v1075 = vmul.f32 %v1043, 0.2
        %v1076 = vmul.f32 %v1044, 0.2
        %v1077 = vmul.f32 %v1045, 0.2
        %v1078 = vmul.f32 %v1046, 0.2
        %v1079 = vmul.f32 %v1047, 0.2
        %v1080 = vmul.f32 %v1048, 0.2
        %v1081 = vmul.f32 %v1049, 0.2
        %v1082 = vmul.f32 %v1050, 0.2
        %v1083 = vmul.f32 %v1051, 0.2
        %v1084 = vmul.f32 %v1052, 0.2
        %v1085 = vmul.f32 %v1053, 0.2
        %v1086 = vmul.f32 %v1054, 0.2
        %v1087 = vmul.f32 %v1055, 0.2
        %v1088 = vmul.f32 %v1056, 0.2
        %v1089 = vmul.f32 %v1057, 0.2
        %v1090 = vmul.f32 %v1058, 0.2
        %v1091 = vsel %vm1059, %v1043, %v1075
        %v1092 = vsel %vm1060, %v1044, %v1076
        %v1093 = vsel %vm1061, %v1045, %v1077
        %v1094 = vsel %vm1062, %v1046, %v1078
        %v1095 = vsel %vm1063, %v1047, %v1079
        %v1096 = vsel %vm1064, %v1048, %v1080
        %v1097 = vsel %vm1065, %v1049, %v1081
        %v1098 = vsel %vm1066, %v1050, %v1082
        %v1099 = vsel %vm1067, %v1051, %v1083
        %v1100 = vsel %vm1068, %v1052, %v1084
        %v1101 = vsel %vm1069, %v1053, %v1085
        %v1102 = vsel %vm1070, %v1054, %v1086
        %v1103 = vsel %vm1071, %v1055, %v1087
        %v1104 = vsel %vm1072, %v1056, %v1088
        %v1105 = vsel %vm1073, %v1057, %v1089
        %v1106 = vsel %vm1074, %v1058, %v1090
        %1107 = vmax.xlane.f32.xlu0 %v1091
        %v1108 = vpop.xlane.xlu0 %1107
        %1109 = vmax.xlane.f32.xlu0 %v1092
        %v1110 = vpop.xlane.xlu0 %1109
        %1111 = vmax.xlane.f32.xlu0 %v1093
        %v1112 = vpop.xlane.xlu0 %1111
        %1113 = vmax.xlane.f32.xlu0 %v1094
        %v1114 = vpop.xlane.xlu0 %1113
        %1115 = vmax.xlane.f32.xlu0 %v1095
        %v1116 = vpop.xlane.xlu0 %1115
        %1117 = vmax.xlane.f32.xlu0 %v1096
        %v1118 = vpop.xlane.xlu0 %1117
        %1119 = vmax.xlane.f32.xlu0 %v1097
        %v1120 = vpop.xlane.xlu0 %1119
        %1121 = vmax.xlane.f32.xlu0 %v1098
        %v1122 = vpop.xlane.xlu0 %1121
        %1123 = vmax.xlane.f32.xlu0 %v1099
        %v1124 = vpop.xlane.xlu0 %1123
        %1125 = vmax.xlane.f32.xlu0 %v1100
        %v1126 = vpop.xlane.xlu0 %1125
        %1127 = vmax.xlane.f32.xlu0 %v1101
        %v1128 = vpop.xlane.xlu0 %1127
        %1129 = vmax.xlane.f32.xlu0 %v1102
        %v1130 = vpop.xlane.xlu0 %1129
        %1131 = vmax.xlane.f32.xlu0 %v1103
        %v1132 = vpop.xlane.xlu0 %1131
        %1133 = vmax.xlane.f32.xlu0 %v1104
        %v1134 = vpop.xlane.xlu0 %1133
        %1135 = vmax.xlane.f32.xlu0 %v1105
        %v1136 = vpop.xlane.xlu0 %1135
        %1137 = vmax.xlane.f32.xlu0 %v1106
        %v1138 = vpop.xlane.xlu0 %1137
        %v1139 = vsub.f32 %v1091, %v1108
        %v1140 = vsub.f32 %v1092, %v1110
        %v1141 = vsub.f32 %v1093, %v1112
        %v1142 = vsub.f32 %v1094, %v1114
        %v1143 = vsub.f32 %v1095, %v1116
        %v1144 = vsub.f32 %v1096, %v1118
        %v1145 = vsub.f32 %v1097, %v1120
        %v1146 = vsub.f32 %v1098, %v1122
        %v1147 = vsub.f32 %v1099, %v1124
        %v1148 = vsub.f32 %v1100, %v1126
        %v1149 = vsub.f32 %v1101, %v1128
        %v1150 = vsub.f32 %v1102, %v1130
        %v1151 = vsub.f32 %v1103, %v1132
        %v1152 = vsub.f32 %v1104, %v1134
        %v1153 = vsub.f32 %v1105, %v1136
        %v1154 = vsub.f32 %v1106, %v1138
        %v1155 = vmul.f32 %v1139, 1.442695
        %v1156 = vpow.pop %v1155
        %v1157 = vmul.f32 %v1140, 1.442695
        %v1158 = vpow.pop %v1157
        %v1159 = vmul.f32 %v1141, 1.442695
        %v1160 = vpow.pop %v1159
        %v1161 = vmul.f32 %v1142, 1.442695
        %v1162 = vpow.pop %v1161
        %v1163 = vmul.f32 %v1143, 1.442695
        %v1164 = vpow.pop %v1163
        %v1165 = vmul.f32 %v1144, 1.442695
        %v1166 = vpow.pop %v1165
        %v1167 = vmul.f32 %v1145, 1.442695
        %v1168 = vpow.pop %v1167
        %v1169 = vmul.f32 %v1146, 1.442695
        %v1170 = vpow.pop %v1169
        %v1171 = vmul.f32 %v1147, 1.442695
        %v1172 = vpow.pop %v1171
        %v1173 = vmul.f32 %v1148, 1.442695
        %v1174 = vpow.pop %v1173
        %v1175 = vmul.f32 %v1149, 1.442695
        %v1176 = vpow.pop %v1175
        %v1177 = vmul.f32 %v1150, 1.442695
        %v1178 = vpow.pop %v1177
        %v1179 = vmul.f32 %v1151, 1.442695
        %v1180 = vpow.pop %v1179
        %v1181 = vmul.f32 %v1152, 1.442695
        %v1182 = vpow.pop %v1181
        %v1183 = vmul.f32 %v1153, 1.442695
        %v1184 = vpow.pop %v1183
        %v1185 = vmul.f32 %v1154, 1.442695
        %v1186 = vpow.pop %v1185
        %1187 = vadd.xlane.f32.xlu0 %v1156
        %v1188 = vpop.xlane.xlu0 %1187
        %1189 = vadd.xlane.f32.xlu0 %v1158
        %v1190 = vpop.xlane.xlu0 %1189
        %1191 = vadd.xlane.f32.xlu0 %v1160
        %v1192 = vpop.xlane.xlu0 %1191
        %1193 = vadd.xlane.f32.xlu0 %v1162
        %v1194 = vpop.xlane.xlu0 %1193
        %1195 = vadd.xlane.f32.xlu0 %v1164
        %v1196 = vpop.xlane.xlu0 %1195
        %1197 = vadd.xlane.f32.xlu0 %v1166
        %v1198 = vpop.xlane.xlu0 %1197
        %1199 = vadd.xlane.f32.xlu0 %v1168
        %v1200 = vpop.xlane.xlu0 %1199
        %1201 = vadd.xlane.f32.xlu0 %v1170
        %v1202 = vpop.xlane.xlu0 %1201
        %1203 = vadd.xlane.f32.xlu0 %v1172
        %v1204 = vpop.xlane.xlu0 %1203
        %1205 = vadd.xlane.f32.xlu0 %v1174
        %v1206 = vpop.xlane.xlu0 %1205
        %1207 = vadd.xlane.f32.xlu0 %v1176
        %v1208 = vpop.xlane.xlu0 %1207
        %1209 = vadd.xlane.f32.xlu0 %v1178
        %v1210 = vpop.xlane.xlu0 %1209
        %1211 = vadd.xlane.f32.xlu0 %v1180
        %v1212 = vpop.xlane.xlu0 %1211
        %1213 = vadd.xlane.f32.xlu0 %v1182
        %v1214 = vpop.xlane.xlu0 %1213
        %1215 = vadd.xlane.f32.xlu0 %v1184
        %v1216 = vpop.xlane.xlu0 %1215
        %1217 = vadd.xlane.f32.xlu0 %v1186
        %v1218 = vpop.xlane.xlu0 %1217
        %v1219 = vrcp.pop %v1188
        %v1220 = vmul.f32 %v1156, %v1219
        %v1221 = vrcp.pop %v1190
        %v1222 = vmul.f32 %v1158, %v1221
        %v1223 = vrcp.pop %v1192
        %v1224 = vmul.f32 %v1160, %v1223
        %v1225 = vrcp.pop %v1194
        %v1226 = vmul.f32 %v1162, %v1225
        %v1227 = vrcp.pop %v1196
        %v1228 = vmul.f32 %v1164, %v1227
        %v1229 = vrcp.pop %v1198
        %v1230 = vmul.f32 %v1166, %v1229
        %v1231 = vrcp.pop %v1200
        %v1232 = vmul.f32 %v1168, %v1231
        %v1233 = vrcp.pop %v1202
        %v1234 = vmul.f32 %v1170, %v1233
        %v1235 = vrcp.pop %v1204
        %v1236 = vmul.f32 %v1172, %v1235
        %v1237 = vrcp.pop %v1206
        %v1238 = vmul.f32 %v1174, %v1237
        %v1239 = vrcp.pop %v1208
        %v1240 = vmul.f32 %v1176, %v1239
        %v1241 = vrcp.pop %v1210
        %v1242 = vmul.f32 %v1178, %v1241
        %v1243 = vrcp.pop %v1212
        %v1244 = vmul.f32 %v1180, %v1243
        %v1245 = vrcp.pop %v1214
        %v1246 = vmul.f32 %v1182, %v1245
        %v1247 = vrcp.pop %v1216
        %v1248 = vmul.f32 %v1184, %v1247
        %v1249 = vrcp.pop %v1218
        %v1250 = vmul.f32 %v1186, %v1249
        %1251 = vmatprep.subr.mxu0 0.0
        %1252 = vmatpush1.msra.mxu0 %v439
        %1253 = vmatprep.subr.mxu0 0.0
        %1254 = vmatpush1.msra.mxu0 %v440
        %1255 = vmatprep.subr.mxu0 0.0
        %1256 = vmatpush1.msra.mxu0 %v441
        %1257 = vmatprep.subr.mxu0 0.0
        %1258 = vmatpush1.msra.mxu0 %v442
        %1259 = vmatprep.subr.mxu0 0.0
        %1260 = vmatpush1.msra.mxu0 %v443
        %1261 = vmatprep.subr.mxu0 0.0
        %1262 = vmatpush1.msra.mxu0 %v444
        %1263 = vmatprep.subr.mxu0 0.0
        %1264 = vmatpush1.msra.mxu0 %v445
        %1265 = vmatprep.subr.mxu0 0.0
        %1266 = vmatpush1.msra.mxu0 %v446
        %1267 = vmatprep.subr.mxu0 0.0
        %1268 = vmatpush1.msra.mxu0 %v447
        %1269 = vmatprep.subr.mxu0 0.0
        %1270 = vmatpush1.msra.mxu0 %v448
        %1271 = vmatprep.subr.mxu0 0.0
        %1272 = vmatpush1.msra.mxu0 %v449
        %1273 = vmatprep.subr.mxu0 0.0
        %1274 = vmatpush1.msra.mxu0 %v450
        %1275 = vmatprep.subr.mxu0 0.0
        %1276 = vmatpush1.msra.mxu0 %v451
        %1277 = vmatprep.subr.mxu0 0.0
        %1278 = vmatpush1.msra.mxu0 %v452
        %1279 = vmatprep.subr.mxu0 0.0
        %1280 = vmatpush1.msra.mxu0 %v453
        %1281 = vmatprep.subr.mxu0 0.0
        %1282 = vmatpush1.msra.mxu0 %v454
        %1283 = vmatprep.subr.mxu0 0.0
        %1284 = vmatpush1.msra.mxu0 0.0
        %1285 = vmatprep.subr.mxu0 0.0
        %1286 = vmatpush1.msra.mxu0 0.0
        %1287 = vmatprep.subr.mxu0 0.0
        %1288 = vmatpush1.msra.mxu0 0.0
        %1289 = vmatprep.subr.mxu0 0.0
        %1290 = vmatpush1.msra.mxu0 0.0
        %1291 = vmatprep.subr.mxu0 0.0
        %1292 = vmatpush1.msra.mxu0 0.0
        %1293 = vmatprep.subr.mxu0 0.0
        %1294 = vmatpush1.msra.mxu0 0.0
        %1295 = vmatprep.subr.mxu0 0.0
        %1296 = vmatpush1.msra.mxu0 0.0
        %1297 = vmatprep.subr.mxu0 0.0
        %1298 = vmatpush1.msra.mxu0 0.0
        %1299 = vmatprep.subr.mxu0 0.0
        %1300 = vmatpush1.msra.mxu0 0.0
        %1301 = vmatprep.subr.mxu0 0.0
        %1302 = vmatpush1.msra.mxu0 0.0
        %1303 = vmatprep.subr.mxu0 0.0
        %1304 = vmatpush1.msra.mxu0 0.0
        %1305 = vmatprep.subr.mxu0 0.0
        %1306 = vmatpush1.msra.mxu0 0.0
        %1307 = vmatprep.subr.mxu0 0.0
        %1308 = vmatpush1.msra.mxu0 0.0
        %1309 = vmatprep.subr.mxu0 0.0
        %1310 = vmatpush1.msra.mxu0 0.0
        %1311 = vmatprep.subr.mxu0 0.0
        %1312 = vmatpush1.msra.mxu0 0.0
        %1313 = vmatprep.subr.mxu0 0.0
        %1314 = vmatpush1.msra.mxu0 0.0
        %1315 = vmatprep.mubr.f32.mxu0 0.0
        %1316 = vmatmul.mubr.f32.gmra.mrb[0].mxu0 %v1220
        %v1317 = vpop.f32.mrb[0].mxu0
        %v1318 = vadd.f32 0.0, %v1317
        %v1319 = vpop.f32.mrb[0].mxu0
        %1320 = vmatprep.mubr.f32.mxu0 0.0
        %1321 = vmatmul.mubr.f32.gmra.mrb[0].mxu0 %v1222
        %v1322 = vpop.f32.mrb[0].mxu0
        %v1323 = vadd.f32 0.0, %v1322
        %v1324 = vpop.f32.mrb[0].mxu0
        %1325 = vmatprep.mubr.f32.mxu0 0.0
        %1326 = vmatmul.mubr.f32.gmra.mrb[0].mxu0 %v1224
        %v1327 = vpop.f32.mrb[0].mxu0
        %v1328 = vadd.f32 0.0, %v1327
        %v1329 = vpop.f32.mrb[0].mxu0
        %1330 = vmatprep.mubr.f32.mxu0 0.0
        %1331 = vmatmul.mubr.f32.gmra.mrb[0].mxu0 %v1226
        %v1332 = vpop.f32.mrb[0].mxu0
        %v1333 = vadd.f32 0.0, %v1332
        %v1334 = vpop.f32.mrb[0].mxu0
        %1335 = vmatprep.mubr.f32.mxu0 0.0
        %1336 = vmatmul.mubr.f32.gmra.mrb[0].mxu0 %v1228
        %v1337 = vpop.f32.mrb[0].mxu0
        %v1338 = vadd.f32 0.0, %v1337
        %v1339 = vpop.f32.mrb[0].mxu0
        %1340 = vmatprep.mubr.f32.mxu0 0.0
        %1341 = vmatmul.mubr.f32.gmra.mrb[0].mxu0 %v1230
        %v1342 = vpop.f32.mrb[0].mxu0
        %v1343 = vadd.f32 0.0, %v1342
        %v1344 = vpop.f32.mrb[0].mxu0
        %1345 = vmatprep.mubr.f32.mxu0 0.0
        %1346 = vmatmul.mubr.f32.gmra.mrb[0].mxu0 %v1232
        %v1347 = vpop.f32.mrb[0].mxu0
        %v1348 = vadd.f32 0.0, %v1347
        %v1349 = vpop.f32.mrb[0].mxu0
        %1350 = vmatprep.mubr.f32.mxu0 0.0
        %1351 = vmatmul.mubr.f32.gmra.mrb[0].mxu0 %v1234
        %v1352 = vpop.f32.mrb[0].mxu0
        %v1353 = vadd.f32 0.0, %v1352
        %v1354 = vpop.f32.mrb[0].mxu0
        %1355 = vmatprep.mubr.f32.mxu0 0.0
        %1356 = vmatmul.mubr.f32.gmra.mrb[0].mxu0 %v1236
        %v1357 = vpop.f32.mrb[0].mxu0
        %v1358 = vadd.f32 0.0, %v1357
        %v1359 = vpop.f32.mrb[0].mxu0
        %1360 = vmatprep.mubr.f32.mxu0 0.0
        %1361 = vmatmul.mubr.f32.gmra.mrb[0].mxu0 %v1238
        %v1362 = vpop.f32.mrb[0].mxu0
        %v1363 = vadd.f32 0.0, %v1362
        %v1364 = vpop.f32.mrb[0].mxu0
        %1365 = vmatprep.mubr.f32.mxu0 0.0
        %1366 = vmatmul.mubr.f32.gmra.mrb[0].mxu0 %v1240
        %v1367 = vpop.f32.mrb[0].mxu0
        %v1368 = vadd.f32 0.0, %v1367
        %v1369 = vpop.f32.mrb[0].mxu0
        %1370 = vmatprep.mubr.f32.mxu0 0.0
        %1371 = vmatmul.mubr.f32.gmra.mrb[0].mxu0 %v1242
        %v1372 = vpop.f32.mrb[0].mxu0
        %v1373 = vadd.f32 0.0, %v1372
        %v1374 = vpop.f32.mrb[0].mxu0
        %1375 = vmatprep.mubr.f32.mxu0 0.0
        %1376 = vmatmul.mubr.f32.gmra.mrb[0].mxu0 %v1244
        %v1377 = vpop.f32.mrb[0].mxu0
        %v1378 = vadd.f32 0.0, %v1377
        %v1379 = vpop.f32.mrb[0].mxu0
        %1380 = vmatprep.mubr.f32.mxu0 0.0
        %1381 = vmatmul.mubr.f32.gmra.mrb[0].mxu0 %v1246
        %v1382 = vpop.f32.mrb[0].mxu0
        %v1383 = vadd.f32 0.0, %v1382
        %v1384 = vpop.f32.mrb[0].mxu0
        %1385 = vmatprep.mubr.f32.mxu0 0.0
        %1386 = vmatmul.mubr.f32.gmra.mrb[0].mxu0 %v1248
        %v1387 = vpop.f32.mrb[0].mxu0
        %v1388 = vadd.f32 0.0, %v1387
        %v1389 = vpop.f32.mrb[0].mxu0
        %1390 = vmatprep.mubr.f32.mxu0 0.0
        %1391 = vmatmul.mubr.f32.gmra.mrb[0].mxu0 %v1250
        %v1392 = vpop.f32.mrb[0].mxu0
        %v1393 = vadd.f32 0.0, %v1392
        %v1394 = vpop.f32.mrb[0].mxu0
        %1395 = vdwg.mxu0
        %1396 = vst [vmem:[%s273] sm:$0xff] %v1318
        %1397 = vst [vmem:[%s273 + $0x8] sm:$0xff] %v1323
        %1398 = vst [vmem:[%s273 + $0x10] sm:$0xff] %v1328
        %1399 = vst [vmem:[%s273 + $0x18] sm:$0xff] %v1333
        %1400 = vst [vmem:[%s273 + $0x20] sm:$0xff] %v1338
        %1401 = vst [vmem:[%s273 + $0x28] sm:$0xff] %v1343
        %1402 = vst [vmem:[%s273 + $0x30] sm:$0xff] %v1348
        %1403 = vst [vmem:[%s273 + $0x38] sm:$0xff] %v1353
        %1404 = vst [vmem:[%s273 + $0x40] sm:$0xff] %v1358
        %1405 = vst [vmem:[%s273 + $0x48] sm:$0xff] %v1363
        %1406 = vst [vmem:[%s273 + $0x50] sm:$0xff] %v1368
        %1407 = vst [vmem:[%s273 + $0x58] sm:$0xff] %v1373
        %1408 = vst [vmem:[%s273 + $0x60] sm:$0xff] %v1378
        %1409 = vst [vmem:[%s273 + $0x68] sm:$0xff] %v1383
        %1410 = vst [vmem:[%s273 + $0x70] sm:$0xff] %v1388
        %1411 = vst [vmem:[%s273 + $0x78] sm:$0xff] %v1393
        %s1412 = sand.u32 %s142, 1
        %s1413 = scalar_lea.sflag [#allocation5], %s1412
        %s1414 = sand.u32 %s142, 1
        %s1415 = smul.addr %s1414, 128
        %s1416 = scalar_lea.vmem [#allocation8], %s1415
        // Predicated region
        $region45: #{tpu_custom_call.1} parent=35 // pred_check
          %p1417 = pneg %p152
        $region46: #{tpu_custom_call.1} parent=35 // pred_check_branch
          %1419 = sbr.rel (%p1417) target = $region48
        $region47: #{tpu_custom_call.1} parent=35 // pred_region
          %s1420 = smul.u32 16, %s29
          %s1422 = ssub.s32 2048, 2048
          %1423 = vsyncadd %s1413, %s1422
          %s1424 = smul.addr %s28, 16
          %s1425 = sadd.s32 %s1420, %s1424
          %s1426 = smul.addr %s1425, 128
          %s1427 = scalar_lea.hbm %s4, %s1426
          %s1428 = sshll.u32 %s1416, 4
          %s1429 = int_to_ptr.vmem [resolvable:$true] %s1428
          %1434 = dma.vmem_to_hbm [thread:$0]  %s1429, 2048, %s1427, %s1413, 128, 128, 8
        $region48: #{tpu_custom_call.1} parent=35 // pred_fallthru
          _
      $region36: #{tpu_custom_call.1} parent=5 // pred_fallthru
        _
      %p1435 = scmp.le.s32.totalorder 2, %s19
      // Predicated region
      $region49: #{tpu_custom_call.1} parent=5 // pred_check
        %p1436 = pneg %p1435
      $region50: #{tpu_custom_call.1} parent=5 // pred_check_branch
        %1438 = sbr.rel (%p1436) target = $region52
      $region51: #{tpu_custom_call.1} parent=5 // pred_region
        %s1439 = ssub.s32 %s19, 2
        // Predicated region
        $region53: #{tpu_custom_call.1} parent=51 // pred_check
          %p1440 = pneg %p158
        $region54: #{tpu_custom_call.1} parent=51 // pred_check_branch
          %1442 = sbr.rel (%p1440) target = $region56
        $region55: #{tpu_custom_call.1} parent=51 // pred_region
          %s1443 = sand.u32 %s143, 1
          %s1444 = scalar_lea.sflag [#allocation5], %s1443
          %s1445 = sand.u32 %s143, 1
          %s1446 = smul.addr %s1445, 128
          %s1447 = scalar_lea.vmem [#allocation8], %s1446
          %1448 = dma.done %s1444, 2048
        $region56: #{tpu_custom_call.1} parent=51 // pred_fallthru
          _
      $region52: #{tpu_custom_call.1} parent=5 // pred_fallthru
        _
    $region6: #{tpu_custom_call.1} parent=1 // loop_footer
      %s23 = sadd.s32 1, %s19
    $region7: #{tpu_custom_call.1} parent=1 // loop_footer_branch
      %18 = sbr.rel target = $region3
    $region8: #{tpu_custom_call.1} parent=1 // loop_exit
      _
    %1449 = vsyncpa [#allocation4], 1
    %s1450 = scalar_lea.sflag [#allocation4], 1
    %1451 = vsyncpa %s1450, 1
    %1452 = vsyncpa [#allocation7], 1
    %s1453 = scalar_lea.sflag [#allocation7], 1
    %1454 = vsyncpa %s1453, 1
    %1455 = vsyncpa [#allocation5], 1
    %s1456 = scalar_lea.sflag [#allocation5], 1
    %1457 = vsyncpa %s1456, 1

</llo_original>
